<compile_context>
chip_gen: v5e
topology: v5e:2x2
jax: 0.10.0
libtpu: 0.0.40
codegen_flags: <defaults>
</compile_context>

<pallas_src>
import jax
import jax.numpy as jnp
import numpy as np
from jax.experimental import pallas as pl
from jax.experimental.pallas import tpu as pltpu

_LANE = 128


def _round_up(x, m):
    return (x + m - 1) // m * m


def _vmem_limit_bytes():
    """Generation-aware scoped-VMEM budget (v7x has 64 MiB/TC, v5e/v6e 128 MiB)."""
    try:
        cap = int(getattr(pltpu.get_tpu_info(), "vmem_capacity_bytes",
                          64 * 1024 * 1024))
    except Exception:
        cap = 64 * 1024 * 1024
    # ~62.5% of physical, capped: 40 MiB on v7x, 80 MiB on v5e/v6e.
    return max(32 * 1024 * 1024, min(int(cap * 0.625), 80 * 1024 * 1024))


def _pick_row_tile(H, W, Cin, Cp, pool, vmem_limit, y_bytes):
    """Largest even divisor TH of H whose working set fits the VMEM budget,
    preferring nT = H/TH >= 2 so the pipeline / megacore has >= 2*N steps."""
    blk_cap = min(8 * 1024 * 1024, vmem_limit // 8)   # per-block output cap

    def fits(th):
        x_blk = (th + 2) * (W + 2) * Cin * 2              # bf16 main+halo input
        scat = (th + 2) * W * 3 * Cin * 2                  # kw-folded scratch
        acc = th * W * Cp * 4                              # f32 accumulator value
        y_blk = th * W * Cp * y_bytes                       # intermediate block
        w_b = 9 * Cin * Cp * 2
        stat = 2 * Cp * 4
        tot = 2 * (x_blk + y_blk + stat) + scat + acc + 2 * w_b
        return tot <= int(vmem_limit * 0.75) and th * W * Cp * 4 <= blk_cap

    cands = [th for th in range(2, H + 1, 2)
             if H % th == 0 and (th * W) % 8 == 0]
    if not cands:
        return H
    good = [th for th in cands if fits(th)]
    if not good:
        return min(cands)
    pref = [th for th in good if H // th >= 2]
    return max(pref) if pref else max(good)


# ---------------------------------------------------------------------------
# Kernel 1: 3x3 conv as 3 kw-folded GEMMs (K = 3*Cin) + BN statistic partials.
# ---------------------------------------------------------------------------
def _conv_gemm_kernel(xm_ref, xh_ref, w_ref, y_ref, stat_ref, scat_ref):
    """xm_ref:(TH, W+2, Cin) bf16 main rows; xh_ref:(2, W+2, Cin) bf16 halo rows;
    w_ref:(3, 3*Cin, Cp) bf16; y_ref:(TH*W, Cp) conv out (bf16 or f32);
    stat_ref:(2, Cp) f32 [sum; sum-of-sq]; scat_ref:(TH+2, W, 3*Cin) bf16."""
    th, wp2, cin = xm_ref.shape
    w = wp2 - 2
    c3 = 3 * cin

    # Assemble the kw-folded input window once per tile: scat[r, x, kw*Cin + c]
    # = padded_input[tile_row r, x + kw, c].  3 strided slices instead of the
    # previous 9 per-tap slice+reshape copies.
    for kw in range(3):
        scat_ref[0:th, :, kw * cin:(kw + 1) * cin] = xm_ref[:, kw:kw + w, :]
        scat_ref[th:th + 2, :, kw * cin:(kw + 1) * cin] = xh_ref[:, kw:kw + w, :]

    # 3 MXU matmuls with K = 3*Cin, accumulated in a local f32 value.
    acc = jnp.dot(scat_ref[0:th].reshape(th * w, c3), w_ref[0],
                  preferred_element_type=jnp.float32)
    for kh in (1, 2):
        acc = acc + jnp.dot(scat_ref[kh:kh + th].reshape(th * w, c3), w_ref[kh],
                            preferred_element_type=jnp.float32)

    # Single store of the conv output (bf16 for the non-pooled path).
    y_ref[...] = acc.astype(y_ref.dtype)

    # Per-tile BN partial statistics from the f32 accumulator.
    # (Single-pass sum / sum-of-squares; fine at these sizes / tolerance.
    #  For very large N*H*W a mean-shifted two-pass scheme would be safer.)
    stat_ref[0:1, :] = jnp.sum(acc, axis=0, keepdims=True)
    stat_ref[1:2, :] = jnp.sum(acc * acc, axis=0, keepdims=True)


# ---------------------------------------------------------------------------
# Kernel 2a: fused BN affine + ReLU (no pooling); reads the bf16 intermediate.
# ---------------------------------------------------------------------------
def _bn_relu_kernel(y_ref, scale_ref, shift_ref, o_ref):
    z = y_ref[...].astype(jnp.float32) * scale_ref[...] + shift_ref[...]
    o_ref[...] = jnp.maximum(z, 0.0)


# ---------------------------------------------------------------------------
# Kernel 2b: fused BN affine + ReLU + 2x2/stride-2 max pool (f32 intermediate).
# ---------------------------------------------------------------------------
def _bn_relu_pool_kernel(y_ref, scale_ref, shift_ref, o_ref):
    """y_ref:(TH*W, Cp) f32, rows ordered (h, w); o_ref:(TH//2, W//2, Cp)."""
    p, c = y_ref.shape
    ho, wo, _ = o_ref.shape
    half = p // 2
    s = scale_ref[...]
    t = shift_ref[...]
    # W-direction pool pairs via stride-2 sublane loads of the flat layout.
    ze = jnp.maximum(y_ref[pl.ds(0, half, stride=2), :] * s + t, 0.0)
    zo = jnp.maximum(y_ref[pl.ds(1, half, stride=2), :] * s + t, 0.0)
    mw = jnp.maximum(ze, zo)                      # rows ordered (h, w2)
    # H-direction pool pairs: adjacent h live W/2 rows apart -> leading split.
    mh = mw.reshape(ho, 2, wo, c)
    o_ref[...] = jnp.maximum(mh[:, 0], mh[:, 1])


# ---------------------------------------------------------------------------
# Wrapper
# ---------------------------------------------------------------------------
def conv_block_forward(x_nchw, w_hwio, b, gamma, beta, *, pool=False, eps=1e-5,
                       row_tile=None):
    """ConvBlock forward. x_nchw: (N, Cin, H, W) f32. Returns NCHW f32."""
    N, Cin, H, W = x_nchw.shape
    KH, KW, Cin_w, Cout = w_hwio.shape
    assert (KH, KW) == (3, 3) and Cin_w == Cin
    assert H % 2 == 0 and W % 2 == 0, "even spatial dims expected"

    # Conv bias is mathematically absorbed by training-mode BatchNorm
    # (the batch mean it subtracts includes the bias), so it is not needed.
    del b
    # TODO(synk): BatchNorm2d's running_mean/running_var buffer updates are a
    # training-time side effect and are not materialized here.

    Cp = _round_up(Cout, _LANE)                     # lane-dense channel width
    vmem_limit = _vmem_limit_bytes()
    # bf16 intermediate for the non-pooled path; the pooled epilogue keeps f32
    # so its stride-2 sublane loads stay on a 32-bit dtype.
    # TODO(synk): a packed (2xbf16 -> u32) layout would let the pooled path use
    # a bf16 intermediate as well.
    y_dtype = jnp.float32 if pool else jnp.bfloat16
    y_bytes = 4 if pool else 2

    TH = row_tile if row_tile is not None else _pick_row_tile(
        H, W, Cin, Cp, pool, vmem_limit, y_bytes)
    assert H % TH == 0 and TH % 2 == 0 and (TH * W) % 8 == 0
    nT = H // TH
    P_blk = TH * W
    halo_blk = TH // 2          # halo block index step (2-row blocks)

    # --- host glue: NCHW -> NHWC, zero-pad spatial by 1, cast to bf16 --------
    x = jnp.transpose(x_nchw, (0, 2, 3, 1)).astype(jnp.float32)      # NHWC
    xp = jnp.pad(x, ((0, 0), (1, 1), (1, 1), (0, 0))).astype(jnp.bfloat16)
    # xp: (N, H+2, W+2, Cin) bf16 -- no haloed copy is materialized; the kernel
    # reads overlapping windows via two Blocked views of this same array.

    # weights: HWIO -> (3, 3*Cin, Cp) bf16 (kw folded into the contraction)
    w3 = w_hwio.astype(jnp.float32).reshape(3, 3 * Cin, Cout)
    w3 = jnp.pad(w3, ((0, 0), (0, 0), (0, Cp - Cout))).astype(jnp.bfloat16)

    flops = 2 * N * H * W * 9 * Cin * Cp
    bytes_accessed = int(N * (H + 2) * (W + 2) * Cin * 2 + w3.size * 2
                         + N * H * W * Cp * y_bytes + N * nT * 2 * Cp * 4)

    # --- Pallas kernel 1: conv GEMM + partial BN statistics ------------------
    y_flat, stats = pl.pallas_call(
        _conv_gemm_kernel,
        out_shape=(
            jax.ShapeDtypeStruct((N, H * W, Cp), y_dtype),
            jax.ShapeDtypeStruct((N, nT, 2, Cp), jnp.float32),
        ),
        grid=(N, nT),
        in_specs=[
            # main window: padded rows [i*TH, i*TH + TH)
            pl.BlockSpec((None, TH, W + 2, Cin), lambda n, i: (n, i, 0, 0)),
            # 2-row halo window: padded rows [(i+1)*TH, (i+1)*TH + 2)
            pl.BlockSpec((None, 2, W + 2, Cin),
                         lambda n, i: (n, (i + 1) * halo_blk, 0, 0)),
            pl.BlockSpec((3, 3 * Cin, Cp), lambda n, i: (0, 0, 0)),
        ],
        out_specs=(
            pl.BlockSpec((None, P_blk, Cp), lambda n, i: (n, i, 0)),
            pl.BlockSpec((None, None, 2, Cp), lambda n, i: (n, i, 0, 0)),
        ),
        scratch_shapes=[pltpu.VMEM((TH + 2, W, 3 * Cin), jnp.bfloat16)],
        compiler_params=pltpu.CompilerParams(
            dimension_semantics=("parallel", "parallel"),
            vmem_limit_bytes=vmem_limit),
        cost_estimate=pl.CostEstimate(flops=flops, transcendentals=0,
                                      bytes_accessed=bytes_accessed),
    )(xp, xp, w3)

    # --- host glue: fold training-mode BN into a per-channel affine ----------
    cnt = jnp.float32(N * H * W)
    s_sum = jnp.sum(stats[:, :, 0, :], axis=(0, 1))          # (Cp,)
    ssq = jnp.sum(stats[:, :, 1, :], axis=(0, 1))            # (Cp,)
    mean = s_sum / cnt
    var = jnp.maximum(ssq / cnt - mean * mean, 0.0)           # biased; clamp >= 0
    inv = jax.lax.rsqrt(var + eps)
    gamma_p = jnp.pad(gamma.astype(jnp.float32), (0, Cp - Cout),
                      constant_values=1.0)
    beta_p = jnp.pad(beta.astype(jnp.float32), (0, Cp - Cout))
    scale = (gamma_p * inv).reshape(1, Cp)
    shift = (beta_p - mean * gamma_p * inv).reshape(1, Cp)

    # --- Pallas kernel 2: BN affine + ReLU (+ 2x2 max pool) ------------------
    epi_params = pltpu.CompilerParams(
        dimension_semantics=("parallel", "parallel"),
        vmem_limit_bytes=vmem_limit)
    if pool:
        out_nhwc = pl.pallas_call(
            _bn_relu_pool_kernel,
            out_shape=jax.ShapeDtypeStruct((N, H // 2, W // 2, Cp), jnp.float32),
            grid=(N, nT),
            in_specs=[
                pl.BlockSpec((None, P_blk, Cp), lambda n, i: (n, i, 0)),
                pl.BlockSpec((1, Cp), lambda n, i: (0, 0)),
                pl.BlockSpec((1, Cp), lambda n, i: (0, 0)),
            ],
            out_specs=pl.BlockSpec((None, TH // 2, W // 2, Cp),
                                   lambda n, i: (n, i, 0, 0)),
            compiler_params=epi_params,
        )(y_flat, scale, shift)
    else:
        out_flat = pl.pallas_call(
            _bn_relu_kernel,
            out_shape=jax.ShapeDtypeStruct((N, H * W, Cp), jnp.float32),
            grid=(N, nT),
            in_specs=[
                pl.BlockSpec((None, P_blk, Cp), lambda n, i: (n, i, 0)),
                pl.BlockSpec((1, Cp), lambda n, i: (0, 0)),
                pl.BlockSpec((1, Cp), lambda n, i: (0, 0)),
            ],
            out_specs=pl.BlockSpec((None, P_blk, Cp), lambda n, i: (n, i, 0)),
            compiler_params=epi_params,
        )(y_flat, scale, shift)
        out_nhwc = out_flat.reshape(N, H, W, Cp)

    # TODO(synk): when ConvBlocks are chained, keep the lane-padded NHWC
    # activation (optionally bf16) between blocks and skip this relayout.
    return jnp.transpose(out_nhwc[..., :Cout], (0, 3, 1, 2))


# ---------------------------------------------------------------------------
# Plain-JAX reference (mirrors the PyTorch module, training-mode BN)
# ---------------------------------------------------------------------------
def reference_conv_block(x_nchw, w_hwio, b, gamma, beta, *, pool=False, eps=1e-5):
    y = jax.lax.conv_general_dilated(
        x_nchw, w_hwio, window_strides=(1, 1), padding="SAME",
        dimension_numbers=("NCHW", "HWIO", "NCHW"),
        precision=jax.lax.Precision.HIGHEST)
    y = y + b[None, :, None, None]
    mean = y.mean(axis=(0, 2, 3), keepdims=True)
    var = y.var(axis=(0, 2, 3), keepdims=True)          # biased
    y = (y - mean) * jax.lax.rsqrt(var + eps)
    y = gamma[None, :, None, None] * y + beta[None, :, None, None]
    y = jnp.maximum(y, 0.0)
    if pool:
        y = jax.lax.reduce_window(y, -jnp.inf, jax.lax.max,
                                  (1, 1, 2, 2), (1, 1, 2, 2), "VALID")
    return y


if __name__ == "__main__":
    # ConvBlock(in_channels=4, out_channels=8), small deterministic problem.
    N, Cin, H, W, Cout = 2, 4, 16, 16, 8
    key = jax.random.PRNGKey(0)
    kx, kw, kb, kg, kbt = jax.random.split(key, 5)

    x = jax.random.normal(kx, (N, Cin, H, W), jnp.float32)
    w_hwio = 0.1 * jax.random.normal(kw, (3, 3, Cin, Cout), jnp.float32)
    b = 0.05 * jax.random.normal(kb, (Cout,), jnp.float32)
    gamma = 1.0 + 0.1 * jax.random.normal(kg, (Cout,), jnp.float32)
    beta = 0.1 * jax.random.normal(kbt, (Cout,), jnp.float32)

    for pool in (False, True):
        for row_tile in (None, 16):   # auto (2 row tiles) and single-tile grids
            out = conv_block_forward(x, w_hwio, b, gamma, beta,
                                     pool=pool, row_tile=row_tile)
            out = jax.block_until_ready(out)
            ref = reference_conv_block(x, w_hwio, b, gamma, beta, pool=pool)
            # bf16 MXU operands (f32 accumulation) -> slightly looser tolerance
            np.testing.assert_allclose(np.asarray(out), np.asarray(ref),
                                       rtol=2e-2, atol=2e-2)

    print("KERNEL_OK")
</pallas_src>

<mosaic_0001>
module attributes {stable_mosaic.version = 11 : i64} {
  func.func @_conv_gemm_kernel(%arg0: i32, %arg1: i32, %arg2: memref<1x8x18x4xbf16, #tpu.memory_space<vmem>>, %arg3: memref<1x2x18x4xbf16, #tpu.memory_space<vmem>>, %arg4: memref<3x12x128xbf16, #tpu.memory_space<vmem>>, %arg5: memref<1x128x128xbf16, #tpu.memory_space<vmem>>, %arg6: memref<1x1x2x128xf32, #tpu.memory_space<vmem>>, %arg7: memref<10x16x12xbf16, #tpu.memory_space<vmem>>) attributes {dimension_semantics = [#tpu.dimension_semantics<parallel>, #tpu.dimension_semantics<parallel>], iteration_bounds = array<i64: 2, 2>, scalar_prefetch = 0 : i64, scratch_operands = 1 : i64, tpu.core_type = #tpu.core_type<tc>, window_params = [{transform_indices = @transform_0, window_bounds = array<i64: 1, 8, 18, 4>}, {transform_indices = @transform_1, window_bounds = array<i64: 1, 2, 18, 4>}, {pipeline_mode = #tpu.pipeline_mode<synchronous>, transform_indices = @transform_2, window_bounds = array<i64: 3, 12, 128>}, {transform_indices = @transform_3, window_bounds = array<i64: 1, 128, 128>}, {transform_indices = @transform_4, window_bounds = array<i64: 1, 1, 2, 128>}]} {
    %c0 = arith.constant 0 : index
    %c0_0 = arith.constant 0 : index
    %c0_1 = arith.constant 0 : index
    %c0_2 = arith.constant 0 : index
    %0 = vector.load %arg2[%c0, %c0_0, %c0_1, %c0_2] : memref<1x8x18x4xbf16, #tpu.memory_space<vmem>>, vector<1x8x16x4xbf16>
    %1 = vector.shape_cast %0 : vector<1x8x16x4xbf16> to vector<8x16x4xbf16>
    %c0_3 = arith.constant 0 : index
    %c0_4 = arith.constant 0 : index
    %c0_5 = arith.constant 0 : index
    %2 = vector.load %arg7[%c0_3, %c0_4, %c0_5] : memref<10x16x12xbf16, #tpu.memory_space<vmem>>, vector<8x16x4xbf16>
    tpu.vector_store %arg7[%c0_3, %c0_4, %c0_5], %1 {strides = array<i32>} : memref<10x16x12xbf16, #tpu.memory_space<vmem>>, vector<8x16x4xbf16>,
    %c0_6 = arith.constant 0 : index
    %c0_7 = arith.constant 0 : index
    %c0_8 = arith.constant 0 : index
    %c0_9 = arith.constant 0 : index
    %3 = vector.load %arg3[%c0_6, %c0_7, %c0_8, %c0_9] : memref<1x2x18x4xbf16, #tpu.memory_space<vmem>>, vector<1x2x16x4xbf16>
    %4 = vector.shape_cast %3 : vector<1x2x16x4xbf16> to vector<2x16x4xbf16>
    %c8 = arith.constant 8 : index
    %c0_10 = arith.constant 0 : index
    %c0_11 = arith.constant 0 : index
    %5 = vector.load %arg7[%c8, %c0_10, %c0_11] : memref<10x16x12xbf16, #tpu.memory_space<vmem>>, vector<2x16x4xbf16>
    tpu.vector_store %arg7[%c8, %c0_10, %c0_11], %4 {strides = array<i32>} : memref<10x16x12xbf16, #tpu.memory_space<vmem>>, vector<2x16x4xbf16>,
    %c0_12 = arith.constant 0 : index
    %c0_13 = arith.constant 0 : index
    %c1 = arith.constant 1 : index
    %c0_14 = arith.constant 0 : index
    %6 = vector.load %arg2[%c0_12, %c0_13, %c1, %c0_14] : memref<1x8x18x4xbf16, #tpu.memory_space<vmem>>, vector<1x8x16x4xbf16>
    %7 = vector.shape_cast %6 : vector<1x8x16x4xbf16> to vector<8x16x4xbf16>
    %c0_15 = arith.constant 0 : index
    %c0_16 = arith.constant 0 : index
    %c4 = arith.constant 4 : index
    %8 = vector.load %arg7[%c0_15, %c0_16, %c4] : memref<10x16x12xbf16, #tpu.memory_space<vmem>>, vector<8x16x4xbf16>
    tpu.vector_store %arg7[%c0_15, %c0_16, %c4], %7 {strides = array<i32>} : memref<10x16x12xbf16, #tpu.memory_space<vmem>>, vector<8x16x4xbf16>,
    %c0_17 = arith.constant 0 : index
    %c0_18 = arith.constant 0 : index
    %c1_19 = arith.constant 1 : index
    %c0_20 = arith.constant 0 : index
    %9 = vector.load %arg3[%c0_17, %c0_18, %c1_19, %c0_20] : memref<1x2x18x4xbf16, #tpu.memory_space<vmem>>, vector<1x2x16x4xbf16>
    %10 = vector.shape_cast %9 : vector<1x2x16x4xbf16> to vector<2x16x4xbf16>
    %c8_21 = arith.constant 8 : index
    %c0_22 = arith.constant 0 : index
    %c4_23 = arith.constant 4 : index
    %11 = vector.load %arg7[%c8_21, %c0_22, %c4_23] : memref<10x16x12xbf16, #tpu.memory_space<vmem>>, vector<2x16x4xbf16>
    tpu.vector_store %arg7[%c8_21, %c0_22, %c4_23], %10 {strides = array<i32>} : memref<10x16x12xbf16, #tpu.memory_space<vmem>>, vector<2x16x4xbf16>,
    %c0_24 = arith.constant 0 : index
    %c0_25 = arith.constant 0 : index
    %c2 = arith.constant 2 : index
    %c0_26 = arith.constant 0 : index
    %12 = vector.load %arg2[%c0_24, %c0_25, %c2, %c0_26] : memref<1x8x18x4xbf16, #tpu.memory_space<vmem>>, vector<1x8x16x4xbf16>
    %13 = vector.shape_cast %12 : vector<1x8x16x4xbf16> to vector<8x16x4xbf16>
    %c0_27 = arith.constant 0 : index
    %c0_28 = arith.constant 0 : index
    %c8_29 = arith.constant 8 : index
    %14 = vector.load %arg7[%c0_27, %c0_28, %c8_29] : memref<10x16x12xbf16, #tpu.memory_space<vmem>>, vector<8x16x4xbf16>
    tpu.vector_store %arg7[%c0_27, %c0_28, %c8_29], %13 {strides = array<i32>} : memref<10x16x12xbf16, #tpu.memory_space<vmem>>, vector<8x16x4xbf16>,
    %c0_30 = arith.constant 0 : index
    %c0_31 = arith.constant 0 : index
    %c2_32 = arith.constant 2 : index
    %c0_33 = arith.constant 0 : index
    %15 = vector.load %arg3[%c0_30, %c0_31, %c2_32, %c0_33] : memref<1x2x18x4xbf16, #tpu.memory_space<vmem>>, vector<1x2x16x4xbf16>
    %16 = vector.shape_cast %15 : vector<1x2x16x4xbf16> to vector<2x16x4xbf16>
    %c8_34 = arith.constant 8 : index
    %c0_35 = arith.constant 0 : index
    %c8_36 = arith.constant 8 : index
    %17 = vector.load %arg7[%c8_34, %c0_35, %c8_36] : memref<10x16x12xbf16, #tpu.memory_space<vmem>>, vector<2x16x4xbf16>
    tpu.vector_store %arg7[%c8_34, %c0_35, %c8_36], %16 {strides = array<i32>} : memref<10x16x12xbf16, #tpu.memory_space<vmem>>, vector<2x16x4xbf16>,
    %c0_37 = arith.constant 0 : index
    %c0_38 = arith.constant 0 : index
    %c0_39 = arith.constant 0 : index
    %18 = vector.load %arg7[%c0_37, %c0_38, %c0_39] : memref<10x16x12xbf16, #tpu.memory_space<vmem>>, vector<8x16x12xbf16>
    %19 = vector.shape_cast %18 : vector<8x16x12xbf16> to vector<128x12xbf16>
    %c0_40 = arith.constant 0 : index
    %c0_41 = arith.constant 0 : index
    %c0_42 = arith.constant 0 : index
    %20 = vector.load %arg4[%c0_40, %c0_41, %c0_42] : memref<3x12x128xbf16, #tpu.memory_space<vmem>>, vector<1x12x128xbf16>
    %21 = vector.shape_cast %20 : vector<1x12x128xbf16> to vector<12x128xbf16>
    %cst = arith.constant dense<0.000000e+00> : vector<128x128xf32>
    %22 = tpu.matmul %19, %21, %cst {dimension_numbers = #tpu.dot_dimension_numbers<[1], [0], [0], [1], [0, 0, 1, 1], [], []>} : vector<128x12xbf16>, vector<12x128xbf16>, vector<128x128xf32> -> vector<128x128xf32>
    %c1_43 = arith.constant 1 : index
    %c0_44 = arith.constant 0 : index
    %c0_45 = arith.constant 0 : index
    %23 = vector.load %arg7[%c1_43, %c0_44, %c0_45] : memref<10x16x12xbf16, #tpu.memory_space<vmem>>, vector<8x16x12xbf16>
    %24 = vector.shape_cast %23 : vector<8x16x12xbf16> to vector<128x12xbf16>
    %c1_46 = arith.constant 1 : index
    %c0_47 = arith.constant 0 : index
    %c0_48 = arith.constant 0 : index
    %25 = vector.load %arg4[%c1_46, %c0_47, %c0_48] : memref<3x12x128xbf16, #tpu.memory_space<vmem>>, vector<1x12x128xbf16>
    %26 = vector.shape_cast %25 : vector<1x12x128xbf16> to vector<12x128xbf16>
    %cst_49 = arith.constant dense<0.000000e+00> : vector<128x128xf32>
    %27 = tpu.matmul %24, %26, %cst_49 {dimension_numbers = #tpu.dot_dimension_numbers<[1], [0], [0], [1], [0, 0, 1, 1], [], []>} : vector<128x12xbf16>, vector<12x128xbf16>, vector<128x128xf32> -> vector<128x128xf32>
    %28 = arith.addf %22, %27 : vector<128x128xf32>
    %c2_50 = arith.constant 2 : index
    %c0_51 = arith.constant 0 : index
    %c0_52 = arith.constant 0 : index
    %29 = vector.load %arg7[%c2_50, %c0_51, %c0_52] : memref<10x16x12xbf16, #tpu.memory_space<vmem>>, vector<8x16x12xbf16>
    %30 = vector.shape_cast %29 : vector<8x16x12xbf16> to vector<128x12xbf16>
    %c2_53 = arith.constant 2 : index
    %c0_54 = arith.constant 0 : index
    %c0_55 = arith.constant 0 : index
    %31 = vector.load %arg4[%c2_53, %c0_54, %c0_55] : memref<3x12x128xbf16, #tpu.memory_space<vmem>>, vector<1x12x128xbf16>
    %32 = vector.shape_cast %31 : vector<1x12x128xbf16> to vector<12x128xbf16>
    %cst_56 = arith.constant dense<0.000000e+00> : vector<128x128xf32>
    %33 = tpu.matmul %30, %32, %cst_56 {dimension_numbers = #tpu.dot_dimension_numbers<[1], [0], [0], [1], [0, 0, 1, 1], [], []>} : vector<128x12xbf16>, vector<12x128xbf16>, vector<128x128xf32> -> vector<128x128xf32>
    %34 = arith.addf %28, %33 : vector<128x128xf32>
    %35 = arith.truncf %34 : vector<128x128xf32> to vector<128x128xbf16>
    %c0_57 = arith.constant 0 : index
    %c0_58 = arith.constant 0 : index
    %c0_59 = arith.constant 0 : index
    %36 = vector.load %arg5[%c0_57, %c0_58, %c0_59] : memref<1x128x128xbf16, #tpu.memory_space<vmem>>, vector<1x128x128xbf16>
    %37 = vector.shape_cast %36 : vector<1x128x128xbf16> to vector<128x128xbf16>
    %38 = vector.shape_cast %35 : vector<128x128xbf16> to vector<1x128x128xbf16>
    tpu.vector_store %arg5[%c0_57, %c0_58, %c0_59], %38 {strides = array<i32>} : memref<1x128x128xbf16, #tpu.memory_space<vmem>>, vector<1x128x128xbf16>,
    %cst_60 = arith.constant dense<0.000000e+00> : vector<128xf32>
    %39 = vector.multi_reduction <add>, %34, %cst_60 [0] : vector<128x128xf32> to vector<128xf32>
    %40 = vector.shape_cast %39 : vector<128xf32> to vector<1x128xf32>
    %c0_61 = arith.constant 0 : index
    %c0_62 = arith.constant 0 : index
    %c0_63 = arith.constant 0 : index
    %c0_64 = arith.constant 0 : index
    %41 = vector.load %arg6[%c0_61, %c0_62, %c0_63, %c0_64] : memref<1x1x2x128xf32, #tpu.memory_space<vmem>>, vector<1x1x1x128xf32>
    %42 = vector.shape_cast %41 : vector<1x1x1x128xf32> to vector<1x128xf32>
    %43 = vector.shape_cast %40 : vector<1x128xf32> to vector<1x1x1x128xf32>
    tpu.vector_store %arg6[%c0_61, %c0_62, %c0_63, %c0_64], %43 {strides = array<i32>} : memref<1x1x2x128xf32, #tpu.memory_space<vmem>>, vector<1x1x1x128xf32>,
    %44 = arith.mulf %34, %34 : vector<128x128xf32>
    %cst_65 = arith.constant dense<0.000000e+00> : vector<128xf32>
    %45 = vector.multi_reduction <add>, %44, %cst_65 [0] : vector<128x128xf32> to vector<128xf32>
    %46 = vector.shape_cast %45 : vector<128xf32> to vector<1x128xf32>
    %c0_66 = arith.constant 0 : index
    %c0_67 = arith.constant 0 : index
    %c1_68 = arith.constant 1 : index
    %c0_69 = arith.constant 0 : index
    %47 = vector.load %arg6[%c0_66, %c0_67, %c1_68, %c0_69] : memref<1x1x2x128xf32, #tpu.memory_space<vmem>>, vector<1x1x1x128xf32>
    %48 = vector.shape_cast %47 : vector<1x1x1x128xf32> to vector<1x128xf32>
    %49 = vector.shape_cast %46 : vector<1x128xf32> to vector<1x1x1x128xf32>
    tpu.vector_store %arg6[%c0_66, %c0_67, %c1_68, %c0_69], %49 {strides = array<i32>} : memref<1x1x2x128xf32, #tpu.memory_space<vmem>>, vector<1x1x1x128xf32>,
    return
  }
  func.func @transform_0(%arg0: i32, %arg1: i32) -> (i32, i32, i32, i32) {
    %c0_i32 = arith.constant 0 : i32
    %c0_i32_0 = arith.constant 0 : i32
    %c0_i32_1 = arith.constant 0 : i32
    return %arg0, %arg1, %c0_i32, %c0_i32_0 : i32, i32, i32, i32
  }
  func.func @transform_1(%arg0: i32, %arg1: i32) -> (i32, i32, i32, i32) {
    %c1_i32 = arith.constant 1 : i32
    %0 = arith.addi %arg1, %c1_i32 : i32
    %c4_i32 = arith.constant 4 : i32
    %1 = arith.muli %0, %c4_i32 : i32
    %c0_i32 = arith.constant 0 : i32
    %c0_i32_0 = arith.constant 0 : i32
    %c0_i32_1 = arith.constant 0 : i32
    return %arg0, %1, %c0_i32, %c0_i32_0 : i32, i32, i32, i32
  }
  func.func @transform_2(%arg0: i32, %arg1: i32) -> (i32, i32, i32) {
    %c0_i32 = arith.constant 0 : i32
    %c0_i32_0 = arith.constant 0 : i32
    %c0_i32_1 = arith.constant 0 : i32
    %c0_i32_2 = arith.constant 0 : i32
    return %c0_i32, %c0_i32_0, %c0_i32_1 : i32, i32, i32
  }
  func.func @transform_3(%arg0: i32, %arg1: i32) -> (i32, i32, i32) {
    %c0_i32 = arith.constant 0 : i32
    %c0_i32_0 = arith.constant 0 : i32
    return %arg0, %arg1, %c0_i32 : i32, i32, i32
  }
  func.func @transform_4(%arg0: i32, %arg1: i32) -> (i32, i32, i32, i32) {
    %c0_i32 = arith.constant 0 : i32
    %c0_i32_0 = arith.constant 0 : i32
    %c0_i32_1 = arith.constant 0 : i32
    return %arg0, %arg1, %c0_i32, %c0_i32_0 : i32, i32, i32, i32
  }
}

</mosaic_0001>

<llo_original>
// kernel: tpu_custom_call.1
$region0: #{tpu_custom_call.1}
  #allocation0 [shape = 'u32[]', space=smem, size = 0x4, offset = 0x4, fixed_abs, tag = 'smem constant byte address 0x4 - core index']
  #allocation1 [shape = 'u32[72,128]{1,0:T(1,128)}', space=vmem, size = 0x9000, scoped, tag = 'internal scratch']
  #allocation2 [shape = 'bf16[10,16,12]{2,1,0:T(8,128)(2,1)}', space=vmem, size = 0xa000, scoped, tag = 'scratch operand']
  %s0 = inlined_call_operand.vmem [shape: bf16[2,18,18,4], index: 0, kind: input, shape index: {}]
  %s1 = inlined_call_operand.vmem [shape: bf16[2,18,18,4], index: 1, kind: input, shape index: {}]
  %s2 = inlined_call_operand.vmem [shape: bf16[3,12,128], index: 2, kind: input, shape index: {}]
  %s3 = inlined_call_operand.hbm [shape: bf16[2,256,128], index: 3, kind: output, shape index: {0}]
  %s4 = inlined_call_operand.hbm [shape: f32[2,2,2,128], index: 4, kind: output, shape index: {1}]
  %5 = xla_tuple %s3, %s4
  %s6 = sld [smem:[#allocation0]]
  $region53: #{tpu_custom_call.1} parent=0
    _
  %s8 = ssub.s32 1, %s6
  %s9 = scalar_select 0, %s8, %s6
  $region1: #{tpu_custom_call.1} parent=0
    #allocation3 [shape = 'u8[65536]{0}', space=vmem, size = 0x10000, scoped, tag = 'output window, operand 0']
    #allocation4 [shape = 's32[2]{0}', space=sflag, size = 0x8, scoped, tag = 'scoped memory for tpu_custom_call.1']
    #allocation5 [shape = 'u8[2048]{0}', space=vmem, size = 0x800, scoped, tag = 'output window, operand 1']
    #allocation6 [shape = 's32[2]{0}', space=sflag, size = 0x8, scoped, tag = 'scoped memory for tpu_custom_call.1']
    %10 = vsyncpa [#allocation4], 0
    %s11 = scalar_lea.sflag [#allocation4], 1
    %12 = vsyncpa %s11, 0
    %13 = vsyncpa [#allocation6], 0
    %s14 = scalar_lea.sflag [#allocation6], 1
    %15 = vsyncpa %s14, 0
    loop: start=0, step=1, limit=6
    $region2: #{tpu_custom_call.1} parent=1 // loop_pre_header
      _
    $region3: #{tpu_custom_call.1} parent=1 // loop_header
      %s17 = sphi 0, %s21
      %p18 = scmp.ge.s32.totalorder %s17, 6
      %s24 = sphi 0, %s36
      %s25 = sphi 0, %s32
      %s26 = sphi 0, %s24
      %s27 = sphi 0, %s25
      %s28 = sphi 0, %s26
      %s29 = sphi 0, %s27
      %s41 = sphi 0, %s43
      %s44 = sphi 0, %s41
      %s45 = sphi 0, %s44
      %s61 = sphi 0, %s45
      %s73 = sphi 0, %s75
      %s76 = sphi 0, %s73
      %s77 = sphi 0, %s76
      %s93 = sphi 0, %s77
      %s97 = sphi 0, %s97
      %s99 = sphi 0, %s97
      %s100 = sphi 0, %s99
      %s114 = sphi 0, %s100
      %s122 = sphi 0, %s124
      %s125 = sphi 0, %s122
      %s126 = sphi 0, %s125
      %s142 = sphi 0, %s126
      %s150 = sphi 0, %s152
      %s153 = sphi 0, %s150
      %s154 = sphi 0, %s153
      %s170 = sphi 0, %s154
    $region4: #{tpu_custom_call.1} parent=1 // loop_header_branch
      %20 = sbr.rel (%p18) target = $region8
    $region5: #{tpu_custom_call.1} parent=1 // loop_body
      %s22 = ssub.s32 %s17, 1
      %s23 = ssub.s32 %s17, 2
      %s30 = sadd.s32 1, %s25
      %p31 = scmp.ge.s32.totalorder %s30, 2
      %s32 = scalar_select %p31, 0, %s30
      %s33 = sadd.s32 1, %s24
      %s34 = scalar_select %p31, %s33, %s24
      %p35 = scmp.ge.s32.totalorder %s34, 2
      %s36 = scalar_select %p35, 0, %s34
      %s37 = ssub.s32 %s24, %s36
      %s38 = ssub.s32 %s25, %s32
      %s39 = sor.u32 %s37, %s38
      %p40 = scmp.eq.s32.totalorder %s39, 0
      %s42 = sadd.s32 %s41, 1
      %s43 = scalar_select %p40, %s41, %s42
      %p46 = pneg %p40
      %p47 = scmp.eq.s32.totalorder %s17, 3
      %p48 = por %p46, %p47
      %p49 = scmp.ne.s32.totalorder %s41, %s44
      %p50 = scmp.eq.s32.totalorder %s17, 0
      %p51 = por %p49, %p50
      %p52 = scmp.ne.s32.totalorder %s41, %s44
      %p53 = scmp.eq.s32.totalorder %s22, 3
      %p54 = por %p52, %p53
      %p55 = scmp.ne.s32.totalorder %s44, %s45
      %p56 = scmp.eq.s32.totalorder %s22, 0
      %p57 = por %p55, %p56
      %p58 = scmp.ne.s32.totalorder %s44, %s45
      %p59 = scmp.eq.s32.totalorder %s23, 3
      %p60 = por %p58, %p59
      %p62 = scmp.ne.s32.totalorder %s45, %s61
      %p63 = scmp.eq.s32.totalorder %s23, 0
      %p64 = por %p62, %p63
      %s65 = sadd.s32 %s25, 1
      %s66 = smul.u32 %s65, 4
      %s67 = sadd.s32 %s32, 1
      %s68 = smul.u32 %s67, 4
      %s69 = ssub.s32 %s24, %s36
      %s70 = ssub.s32 %s66, %s68
      %s71 = sor.u32 %s69, %s70
      %p72 = scmp.eq.s32.totalorder %s71, 0
      %s74 = sadd.s32 %s73, 1
      %s75 = scalar_select %p72, %s73, %s74
      %p78 = pneg %p72
      %p79 = scmp.eq.s32.totalorder %s17, 3
      %p80 = por %p78, %p79
      %p81 = scmp.ne.s32.totalorder %s73, %s76
      %p82 = scmp.eq.s32.totalorder %s17, 0
      %p83 = por %p81, %p82
      %p84 = scmp.ne.s32.totalorder %s73, %s76
      %p85 = scmp.eq.s32.totalorder %s22, 3
      %p86 = por %p84, %p85
      %p87 = scmp.ne.s32.totalorder %s76, %s77
      %p88 = scmp.eq.s32.totalorder %s22, 0
      %p89 = por %p87, %p88
      %p90 = scmp.ne.s32.totalorder %s76, %s77
      %p91 = scmp.eq.s32.totalorder %s23, 3
      %p92 = por %p90, %p91
      %p94 = scmp.ne.s32.totalorder %s77, %s93
      %p95 = scmp.eq.s32.totalorder %s23, 0
      %p96 = por %p94, %p95
      %s98 = sadd.s32 %s97, 1
      %p101 = scmp.eq.s32.totalorder %s17, 3
      %p102 = scmp.ne.s32.totalorder %s97, %s99
      %p103 = scmp.eq.s32.totalorder %s17, 0
      %p104 = por %p102, %p103
      %p105 = scmp.ne.s32.totalorder %s97, %s99
      %p106 = scmp.eq.s32.totalorder %s22, 3
      %p107 = por %p105, %p106
      %p108 = scmp.ne.s32.totalorder %s99, %s100
      %p109 = scmp.eq.s32.totalorder %s22, 0
      %p110 = por %p108, %p109
      %p111 = scmp.ne.s32.totalorder %s99, %s100
      %p112 = scmp.eq.s32.totalorder %s23, 3
      %p113 = por %p111, %p112
      %p115 = scmp.ne.s32.totalorder %s100, %s114
      %p116 = scmp.eq.s32.totalorder %s23, 0
      %p117 = por %p115, %p116
      %s118 = ssub.s32 %s24, %s36
      %s119 = ssub.s32 %s25, %s32
      %s120 = sor.u32 %s118, %s119
      %p121 = scmp.eq.s32.totalorder %s120, 0
      %s123 = sadd.s32 %s122, 1
      %s124 = scalar_select %p121, %s122, %s123
      %p127 = pneg %p121
      %p128 = scmp.eq.s32.totalorder %s17, 3
      %p129 = por %p127, %p128
      %p130 = scmp.ne.s32.totalorder %s122, %s125
      %p131 = scmp.eq.s32.totalorder %s17, 0
      %p132 = por %p130, %p131
      %p133 = scmp.ne.s32.totalorder %s122, %s125
      %p134 = scmp.eq.s32.totalorder %s22, 3
      %p135 = por %p133, %p134
      %p136 = scmp.ne.s32.totalorder %s125, %s126
      %p137 = scmp.eq.s32.totalorder %s22, 0
      %p138 = por %p136, %p137
      %p139 = scmp.ne.s32.totalorder %s125, %s126
      %p140 = scmp.eq.s32.totalorder %s23, 3
      %p141 = por %p139, %p140
      %p143 = scmp.ne.s32.totalorder %s126, %s142
      %p144 = scmp.eq.s32.totalorder %s23, 0
      %p145 = por %p143, %p144
      %s146 = ssub.s32 %s24, %s36
      %s147 = ssub.s32 %s25, %s32
      %s148 = sor.u32 %s146, %s147
      %p149 = scmp.eq.s32.totalorder %s148, 0
      %s151 = sadd.s32 %s150, 1
      %s152 = scalar_select %p149, %s150, %s151
      %p155 = pneg %p149
      %p156 = scmp.eq.s32.totalorder %s17, 3
      %p157 = por %p155, %p156
      %p158 = scmp.ne.s32.totalorder %s150, %s153
      %p159 = scmp.eq.s32.totalorder %s17, 0
      %p160 = por %p158, %p159
      %p161 = scmp.ne.s32.totalorder %s150, %s153
      %p162 = scmp.eq.s32.totalorder %s22, 3
      %p163 = por %p161, %p162
      %p164 = scmp.ne.s32.totalorder %s153, %s154
      %p165 = scmp.eq.s32.totalorder %s22, 0
      %p166 = por %p164, %p165
      %p167 = scmp.ne.s32.totalorder %s153, %s154
      %p168 = scmp.eq.s32.totalorder %s23, 3
      %p169 = por %p167, %p168
      %p171 = scmp.ne.s32.totalorder %s154, %s170
      %p172 = scmp.eq.s32.totalorder %s23, 0
      %p173 = por %p171, %p172
      %p174 = scmp.le.s32.totalorder 1, %s17
      %p175 = scmp.lt.s32.totalorder %s17, 5
      %p176 = pnand %p174, %p175
      %p177 = pneg %p176
      // Predicated region
      $region9: #{tpu_custom_call.1} parent=5 // pred_check
        _
      $region10: #{tpu_custom_call.1} parent=5 // pred_check_branch
        %179 = sbr.rel (%p176) target = $region12
      $region11: #{tpu_custom_call.1} parent=5 // pred_region
        %s180 = ssub.s32 %s17, 1
        // Predicated region
        $region13: #{tpu_custom_call.1} parent=11 // pred_check
          %p181 = pneg %p110
        $region14: #{tpu_custom_call.1} parent=11 // pred_check_branch
          %183 = sbr.rel (%p181) target = $region16
        $region15: #{tpu_custom_call.1} parent=11 // pred_region
          _
        $region16: #{tpu_custom_call.1} parent=11 // pred_fallthru
          _
      $region12: #{tpu_custom_call.1} parent=5 // pred_fallthru
        _
      %p184 = scmp.lt.s32.totalorder %s17, 4
      // Predicated region
      $region17: #{tpu_custom_call.1} parent=5 // pred_check
        %p185 = pneg %p184
      $region18: #{tpu_custom_call.1} parent=5 // pred_check_branch
        %187 = sbr.rel (%p185) target = $region20
      $region19: #{tpu_custom_call.1} parent=5 // pred_region
        // Predicated region
        $region21: #{tpu_custom_call.1} parent=19 // pred_check
          %p188 = pneg %p51
        $region22: #{tpu_custom_call.1} parent=19 // pred_check_branch
          %190 = sbr.rel (%p188) target = $region24
        $region23: #{tpu_custom_call.1} parent=19 // pred_region
          %s191 = smul.u32 8, %s25
          %s192 = ssub.s32 18, %s191
          %p193 = scmp.lt.s32.totalorder %s192, 8
          %s194 = scalar_select %p193, %s192, 8
          %s195 = smul.u32 4, %s194
          %s196 = smul.u32 %s195, 3
          %p197 = scmp.lt.s32.totalorder %s24, 1
          %s198 = scalar_select %p197, %s24, 1
          %p199 = scmp.lt.s32.totalorder %s191, 17
          %s200 = scalar_select %p199, %s191, 17
          %s201 = smul.addr %s200, 3
          %s202 = smul.addr %s198, 54
          %s203 = sadd.s32 %s201, %s202
          %s204 = smul.addr %s203, 4
          %s205 = scalar_lea.vmem %s0, %s204
          %s206 = smul.u32 8, %s25
          %s207 = ssub.s32 18, %s206
          %p208 = scmp.lt.s32.totalorder %s207, 8
          %s209 = scalar_select %p208, %s207, 8
          %s210 = smul.u32 4, %s209
          %s211 = smul.u32 %s210, 3
        $region24: #{tpu_custom_call.1} parent=19 // pred_fallthru
          _
        // Predicated region
        $region25: #{tpu_custom_call.1} parent=19 // pred_check
          %p212 = pneg %p83
        $region26: #{tpu_custom_call.1} parent=19 // pred_check_branch
          %214 = sbr.rel (%p212) target = $region28
        $region27: #{tpu_custom_call.1} parent=19 // pred_region
          %s215 = sadd.s32 %s25, 1
          %s216 = smul.u32 %s215, 4
          %s217 = smul.u32 2, %s216
          %p218 = scmp.lt.s32.totalorder %s24, 1
          %s219 = scalar_select %p218, %s24, 1
          %p220 = scmp.lt.s32.totalorder %s217, 17
          %s221 = scalar_select %p220, %s217, 17
          %s222 = smul.addr %s221, 3
          %s223 = smul.addr %s219, 54
          %s224 = sadd.s32 %s222, %s223
          %s225 = smul.addr %s224, 4
          %s226 = scalar_lea.vmem %s1, %s225
          %s227 = sadd.s32 %s25, 1
          %s228 = smul.u32 %s227, 4
          %s229 = smul.u32 2, %s228
        $region28: #{tpu_custom_call.1} parent=19 // pred_fallthru
          _
      $region20: #{tpu_custom_call.1} parent=5 // pred_fallthru
        _
      %p230 = scmp.le.s32.totalorder 1, %s17
      %p231 = scmp.lt.s32.totalorder %s17, 5
      %p232 = pnand %p230, %p231
      %p233 = pneg %p232
      // Predicated region
      $region29: #{tpu_custom_call.1} parent=5 // pred_check
        _
      $region30: #{tpu_custom_call.1} parent=5 // pred_check_branch
        %235 = sbr.rel (%p232) target = $region32
      $region31: #{tpu_custom_call.1} parent=5 // pred_region
        %s236 = ssub.s32 %s17, 1
        %s237 = smul.u32 8, %s27
        %s238 = ssub.s32 18, %s237
        %p239 = scmp.lt.s32.totalorder %s238, 8
        %s240 = scalar_select %p239, %s238, 8
        %s241 = smul.u32 4, %s240
        %s242 = smul.u32 %s241, 3
        %p243 = scmp.lt.s32.totalorder %s26, 1
        %s244 = scalar_select %p243, %s26, 1
        %p245 = scmp.lt.s32.totalorder %s237, 17
        %s246 = scalar_select %p245, %s237, 17
        %s247 = smul.addr %s246, 3
        %s248 = smul.addr %s244, 54
        %s249 = sadd.s32 %s247, %s248
        %s250 = smul.addr %s249, 4
        %s251 = scalar_lea.vmem %s0, %s250
        %p252 = pneg %p57
        %p253 = pneg %p54
        %s254 = sadd.s32 %s27, 1
        %s255 = smul.u32 %s254, 4
        %s256 = smul.u32 2, %s255
        %p257 = scmp.lt.s32.totalorder %s26, 1
        %s258 = scalar_select %p257, %s26, 1
        %p259 = scmp.lt.s32.totalorder %s256, 17
        %s260 = scalar_select %p259, %s256, 17
        %s261 = smul.addr %s260, 3
        %s262 = smul.addr %s258, 54
        %s263 = sadd.s32 %s261, %s262
        %s264 = smul.addr %s263, 4
        %s265 = scalar_lea.vmem %s1, %s264
        %p266 = pneg %p89
        %p267 = pneg %p86
        %p268 = pneg %p110
        %p269 = pneg %p107
        %p270 = pneg %p138
        %p271 = pneg %p135
        %s272 = sand.u32 %s125, 1
        %s273 = scalar_lea.sflag [#allocation4], %s272
        %s274 = sand.u32 %s125, 1
        %s275 = smul.addr %s274, 64
        %s276 = scalar_lea.vmem [#allocation3], %s275
        %p277 = pneg %p166
        %p278 = pneg %p163
        %s279 = sand.u32 %s153, 1
        %s280 = scalar_lea.sflag [#allocation6], %s279
        %s281 = sand.u32 %s153, 1
        %s282 = smul.addr %s281, 2
        %s283 = scalar_lea.vmem [#allocation5], %s282
        %s284 = smul.u32 8, %s27
        %s285 = ssub.s32 18, %s284
        %p286 = scmp.lt.s32.totalorder %s285, 8
        %s287 = scalar_select %p286, %s285, 8
        %s288 = smul.u32 4, %s287
        %s289 = smul.u32 %s288, 3
        %p290 = scmp.lt.s32.totalorder %s26, 1
        %s291 = scalar_select %p290, %s26, 1
        %p292 = scmp.lt.s32.totalorder %s284, 17
        %s293 = scalar_select %p292, %s284, 17
        %s294 = smul.addr %s293, 3
        %s295 = smul.addr %s291, 54
        %s296 = sadd.s32 %s294, %s295
        %s297 = smul.addr %s296, 4
        %s298 = scalar_lea.vmem %s0, %s297
        %s299 = smul.u32 8, %s27
        %s300 = ssub.s32 18, %s299
        %p301 = scmp.lt.s32.totalorder %s300, 8
        %s302 = scalar_select %p301, %s300, 8
        %s303 = smul.u32 4, %s302
        %s304 = smul.u32 %s303, 3
        %s305 = sadd.s32 %s27, 1
        %s306 = smul.u32 %s305, 4
        %s307 = smul.u32 2, %s306
        %p308 = scmp.lt.s32.totalorder %s26, 1
        %s309 = scalar_select %p308, %s26, 1
        %p310 = scmp.lt.s32.totalorder %s307, 17
        %s311 = scalar_select %p310, %s307, 17
        %s312 = smul.addr %s311, 3
        %s313 = smul.addr %s309, 54
        %s314 = sadd.s32 %s312, %s313
        %s315 = smul.addr %s314, 4
        %s316 = scalar_lea.vmem %s1, %s315
        %s317 = sadd.s32 %s27, 1
        %s318 = smul.u32 %s317, 4
        %s319 = smul.u32 2, %s318
        %s320 = smul.u32 16, %s27
        %v322 = vld [vmem:[%s298] sm:$0xf]
        %v323 = vld [vmem:[%s298 + $0x4] sm:$0xf]
        %v324 = vld [vmem:[%s298 + $0xc] sm:$0xf]
        %v325 = vld [vmem:[%s298 + $0x10] sm:$0xf]
        %v326 = vld [vmem:[%s298 + $0x18] sm:$0xf]
        %v327 = vld [vmem:[%s298 + $0x1c] sm:$0xf]
        %v328 = vld [vmem:[%s298 + $0x24] sm:$0xf]
        %v329 = vld [vmem:[%s298 + $0x28] sm:$0xf]
        %v330 = vld [vmem:[%s298 + $0x30] sm:$0xf]
        %v331 = vld [vmem:[%s298 + $0x34] sm:$0xf]
        %v332 = vld [vmem:[%s298 + $0x3c] sm:$0xf]
        %v333 = vld [vmem:[%s298 + $0x40] sm:$0xf]
        %v334 = vld [vmem:[%s298 + $0x48] sm:$0xf]
        %v335 = vld [vmem:[%s298 + $0x4c] sm:$0xf]
        %v336 = vld [vmem:[%s298 + $0x54] sm:$0xf]
        %v337 = vld [vmem:[%s298 + $0x58] sm:$0xf]
        %vm338 = vcmask 27648
        %339 = vst.msk [vmem:[#allocation2] sm:$0xf] %vm338, %v322
        %340 = vst.msk [vmem:[#allocation2 + $0x4] sm:$0xf] %vm338, %v323
        %341 = vst.msk [vmem:[#allocation2 + $0x8] sm:$0xf] %vm338, %v324
        %342 = vst.msk [vmem:[#allocation2 + $0xc] sm:$0xf] %vm338, %v325
        %343 = vst.msk [vmem:[#allocation2 + $0x10] sm:$0xf] %vm338, %v326
        %344 = vst.msk [vmem:[#allocation2 + $0x14] sm:$0xf] %vm338, %v327
        %345 = vst.msk [vmem:[#allocation2 + $0x18] sm:$0xf] %vm338, %v328
        %346 = vst.msk [vmem:[#allocation2 + $0x1c] sm:$0xf] %vm338, %v329
        %347 = vst.msk [vmem:[#allocation2 + $0x20] sm:$0xf] %vm338, %v330
        %348 = vst.msk [vmem:[#allocation2 + $0x24] sm:$0xf] %vm338, %v331
        %349 = vst.msk [vmem:[#allocation2 + $0x28] sm:$0xf] %vm338, %v332
        %350 = vst.msk [vmem:[#allocation2 + $0x2c] sm:$0xf] %vm338, %v333
        %351 = vst.msk [vmem:[#allocation2 + $0x30] sm:$0xf] %vm338, %v334
        %352 = vst.msk [vmem:[#allocation2 + $0x34] sm:$0xf] %vm338, %v335
        %353 = vst.msk [vmem:[#allocation2 + $0x38] sm:$0xf] %vm338, %v336
        %354 = vst.msk [vmem:[#allocation2 + $0x3c] sm:$0xf] %vm338, %v337
        %v355 = vld [vmem:[%s316] sm:$0xf]
        %v356 = vld [vmem:[%s316 + $0x4] sm:$0xf]
        %v357 = vld [vmem:[%s316 + $0xc] sm:$0xf]
        %v358 = vld [vmem:[%s316 + $0x10] sm:$0xf]
        %s359 = scalar_lea.vmem [#allocation2], 64
        %360 = vst.msk [vmem:[%s359] sm:$0xf] %vm338, %v355
        %361 = vst.msk [vmem:[%s359 + $0x4] sm:$0xf] %vm338, %v356
        %362 = vst.msk [vmem:[%s359 + $0x8] sm:$0xf] %vm338, %v357
        %363 = vst.msk [vmem:[%s359 + $0xc] sm:$0xf] %vm338, %v358
        %v364 = vld [vmem:[%s298] sm:$0xf]
        %v365 = vld [vmem:[%s298 + $0x4] sm:$0xf]
        %v366 = vld [vmem:[%s298 + $0x8] sm:$0x1]
        %v367 = vld [vmem:[%s298 + $0xc] sm:$0xf]
        %v368 = vld [vmem:[%s298 + $0x10] sm:$0xf]
        %v369 = vld [vmem:[%s298 + $0x14] sm:$0x1]
        %v370 = vld [vmem:[%s298 + $0x18] sm:$0xf]
        %v371 = vld [vmem:[%s298 + $0x1c] sm:$0xf]
        %v372 = vld [vmem:[%s298 + $0x20] sm:$0x1]
        %v373 = vld [vmem:[%s298 + $0x24] sm:$0xf]
        %v374 = vld [vmem:[%s298 + $0x28] sm:$0xf]
        %v375 = vld [vmem:[%s298 + $0x2c] sm:$0x1]
        %v376 = vld [vmem:[%s298 + $0x30] sm:$0xf]
        %v377 = vld [vmem:[%s298 + $0x34] sm:$0xf]
        %v378 = vld [vmem:[%s298 + $0x38] sm:$0x1]
        %v379 = vld [vmem:[%s298 + $0x3c] sm:$0xf]
        %v380 = vld [vmem:[%s298 + $0x40] sm:$0xf]
        %v381 = vld [vmem:[%s298 + $0x44] sm:$0x1]
        %v382 = vld [vmem:[%s298 + $0x48] sm:$0xf]
        %v383 = vld [vmem:[%s298 + $0x4c] sm:$0xf]
        %v384 = vld [vmem:[%s298 + $0x50] sm:$0x1]
        %v385 = vld [vmem:[%s298 + $0x54] sm:$0xf]
        %v386 = vld [vmem:[%s298 + $0x58] sm:$0xf]
        %v387 = vld [vmem:[%s298 + $0x5c] sm:$0x1]
        %vm388 = vsmask.f32 3328
        %vm389 = vsmask.f32 7440
        %vm390 = vmor %vm388, %vm389
        %v392 = vshrl.u32 %v364, 16
        %v394 = vrot.slane %v392, 4
        %v395 = vshll.u32 %v364, 16
        %v397 = vrot.slane %v395, 5
        %v398 = vor.u32 %v394, %v397
        %v399 = vrot.slane %v398, 4
        %v401 = vshll.u32 %v365, 16
        %v403 = vrot.slane %v401, 5
        %v404 = vsel %vm390, %v399, %v403
        %v405 = vshrl.u32 %v365, 16
        %v407 = vrot.slane %v405, 4
        %v408 = vor.u32 %v407, %v403
        %v409 = vrot.slane %v408, 4
        %v411 = vshll.u32 %v366, 16
        %v413 = vrot.slane %v411, 5
        %v414 = vsel %vm390, %v409, %v413
        %v416 = vshrl.u32 %v367, 16
        %v418 = vrot.slane %v416, 4
        %v419 = vshll.u32 %v367, 16
        %v421 = vrot.slane %v419, 5
        %v422 = vor.u32 %v418, %v421
        %v423 = vrot.slane %v422, 4
        %v425 = vshll.u32 %v368, 16
        %v427 = vrot.slane %v425, 5
        %v428 = vsel %vm390, %v423, %v427
        %v429 = vshrl.u32 %v368, 16
        %v431 = vrot.slane %v429, 4
        %v432 = vor.u32 %v431, %v427
        %v433 = vrot.slane %v432, 4
        %v435 = vshll.u32 %v369, 16
        %v437 = vrot.slane %v435, 5
        %v438 = vsel %vm390, %v433, %v437
        %v440 = vshrl.u32 %v370, 16
        %v442 = vrot.slane %v440, 4
        %v443 = vshll.u32 %v370, 16
        %v445 = vrot.slane %v443, 5
        %v446 = vor.u32 %v442, %v445
        %v447 = vrot.slane %v446, 4
        %v449 = vshll.u32 %v371, 16
        %v451 = vrot.slane %v449, 5
        %v452 = vsel %vm390, %v447, %v451
        %v453 = vshrl.u32 %v371, 16
        %v455 = vrot.slane %v453, 4
        %v456 = vor.u32 %v455, %v451
        %v457 = vrot.slane %v456, 4
        %v459 = vshll.u32 %v372, 16
        %v461 = vrot.slane %v459, 5
        %v462 = vsel %vm390, %v457, %v461
        %v464 = vshrl.u32 %v373, 16
        %v466 = vrot.slane %v464, 4
        %v467 = vshll.u32 %v373, 16
        %v469 = vrot.slane %v467, 5
        %v470 = vor.u32 %v466, %v469
        %v471 = vrot.slane %v470, 4
        %v473 = vshll.u32 %v374, 16
        %v475 = vrot.slane %v473, 5
        %v476 = vsel %vm390, %v471, %v475
        %v477 = vshrl.u32 %v374, 16
        %v479 = vrot.slane %v477, 4
        %v480 = vor.u32 %v479, %v475
        %v481 = vrot.slane %v480, 4
        %v483 = vshll.u32 %v375, 16
        %v485 = vrot.slane %v483, 5
        %v486 = vsel %vm390, %v481, %v485
        %v488 = vshrl.u32 %v376, 16
        %v490 = vrot.slane %v488, 4
        %v491 = vshll.u32 %v376, 16
        %v493 = vrot.slane %v491, 5
        %v494 = vor.u32 %v490, %v493
        %v495 = vrot.slane %v494, 4
        %v497 = vshll.u32 %v377, 16
        %v499 = vrot.slane %v497, 5
        %v500 = vsel %vm390, %v495, %v499
        %v501 = vshrl.u32 %v377, 16
        %v503 = vrot.slane %v501, 4
        %v504 = vor.u32 %v503, %v499
        %v505 = vrot.slane %v504, 4
        %v507 = vshll.u32 %v378, 16
        %v509 = vrot.slane %v507, 5
        %v510 = vsel %vm390, %v505, %v509
        %v512 = vshrl.u32 %v379, 16
        %v514 = vrot.slane %v512, 4
        %v515 = vshll.u32 %v379, 16
        %v517 = vrot.slane %v515, 5
        %v518 = vor.u32 %v514, %v517
        %v519 = vrot.slane %v518, 4
        %v521 = vshll.u32 %v380, 16
        %v523 = vrot.slane %v521, 5
        %v524 = vsel %vm390, %v519, %v523
        %v525 = vshrl.u32 %v380, 16
        %v527 = vrot.slane %v525, 4
        %v528 = vor.u32 %v527, %v523
        %v529 = vrot.slane %v528, 4
        %v531 = vshll.u32 %v381, 16
        %v533 = vrot.slane %v531, 5
        %v534 = vsel %vm390, %v529, %v533
        %v536 = vshrl.u32 %v382, 16
        %v538 = vrot.slane %v536, 4
        %v539 = vshll.u32 %v382, 16
        %v541 = vrot.slane %v539, 5
        %v542 = vor.u32 %v538, %v541
        %v543 = vrot.slane %v542, 4
        %v545 = vshll.u32 %v383, 16
        %v547 = vrot.slane %v545, 5
        %v548 = vsel %vm390, %v543, %v547
        %v549 = vshrl.u32 %v383, 16
        %v551 = vrot.slane %v549, 4
        %v552 = vor.u32 %v551, %v547
        %v553 = vrot.slane %v552, 4
        %v555 = vshll.u32 %v384, 16
        %v557 = vrot.slane %v555, 5
        %v558 = vsel %vm390, %v553, %v557
        %v560 = vshrl.u32 %v385, 16
        %v562 = vrot.slane %v560, 4
        %v563 = vshll.u32 %v385, 16
        %v565 = vrot.slane %v563, 5
        %v566 = vor.u32 %v562, %v565
        %v567 = vrot.slane %v566, 4
        %v569 = vshll.u32 %v386, 16
        %v571 = vrot.slane %v569, 5
        %v572 = vsel %vm390, %v567, %v571
        %v573 = vshrl.u32 %v386, 16
        %v575 = vrot.slane %v573, 4
        %v576 = vor.u32 %v575, %v571
        %v577 = vrot.slane %v576, 4
        %v579 = vshll.u32 %v387, 16
        %v581 = vrot.slane %v579, 5
        %v582 = vsel %vm390, %v577, %v581
        %583 = vrot.lane.b32.xlu0 %v404, 4
        %v584 = vpop.permute.xlu0 %583
        %585 = vrot.lane.b32.xlu0 %v414, 4
        %v586 = vpop.permute.xlu0 %585
        %587 = vrot.lane.b32.xlu0 %v428, 4
        %v588 = vpop.permute.xlu0 %587
        %589 = vrot.lane.b32.xlu0 %v438, 4
        %v590 = vpop.permute.xlu0 %589
        %591 = vrot.lane.b32.xlu0 %v452, 4
        %v592 = vpop.permute.xlu0 %591
        %593 = vrot.lane.b32.xlu0 %v462, 4
        %v594 = vpop.permute.xlu0 %593
        %595 = vrot.lane.b32.xlu0 %v476, 4
        %v596 = vpop.permute.xlu0 %595
        %597 = vrot.lane.b32.xlu0 %v486, 4
        %v598 = vpop.permute.xlu0 %597
        %599 = vrot.lane.b32.xlu0 %v500, 4
        %v600 = vpop.permute.xlu0 %599
        %601 = vrot.lane.b32.xlu0 %v510, 4
        %v602 = vpop.permute.xlu0 %601
        %603 = vrot.lane.b32.xlu0 %v524, 4
        %v604 = vpop.permute.xlu0 %603
        %605 = vrot.lane.b32.xlu0 %v534, 4
        %v606 = vpop.permute.xlu0 %605
        %607 = vrot.lane.b32.xlu0 %v548, 4
        %v608 = vpop.permute.xlu0 %607
        %609 = vrot.lane.b32.xlu0 %v558, 4
        %v610 = vpop.permute.xlu0 %609
        %611 = vrot.lane.b32.xlu0 %v572, 4
        %v612 = vpop.permute.xlu0 %611
        %613 = vrot.lane.b32.xlu0 %v582, 4
        %v614 = vpop.permute.xlu0 %613
        %vm631 = vcmask 60448
        %632 = vst.msk [vmem:[#allocation2] sm:$0xf] %vm631, %v584
        %633 = vst.msk [vmem:[#allocation2 + $0x4] sm:$0xf] %vm631, %v586
        %634 = vst.msk [vmem:[#allocation2 + $0x8] sm:$0xf] %vm631, %v588
        %635 = vst.msk [vmem:[#allocation2 + $0xc] sm:$0xf] %vm631, %v590
        %636 = vst.msk [vmem:[#allocation2 + $0x10] sm:$0xf] %vm631, %v592
        %637 = vst.msk [vmem:[#allocation2 + $0x14] sm:$0xf] %vm631, %v594
        %638 = vst.msk [vmem:[#allocation2 + $0x18] sm:$0xf] %vm631, %v596
        %639 = vst.msk [vmem:[#allocation2 + $0x1c] sm:$0xf] %vm631, %v598
        %640 = vst.msk [vmem:[#allocation2 + $0x20] sm:$0xf] %vm631, %v600
        %641 = vst.msk [vmem:[#allocation2 + $0x24] sm:$0xf] %vm631, %v602
        %642 = vst.msk [vmem:[#allocation2 + $0x28] sm:$0xf] %vm631, %v604
        %643 = vst.msk [vmem:[#allocation2 + $0x2c] sm:$0xf] %vm631, %v606
        %644 = vst.msk [vmem:[#allocation2 + $0x30] sm:$0xf] %vm631, %v608
        %645 = vst.msk [vmem:[#allocation2 + $0x34] sm:$0xf] %vm631, %v610
        %646 = vst.msk [vmem:[#allocation2 + $0x38] sm:$0xf] %vm631, %v612
        %647 = vst.msk [vmem:[#allocation2 + $0x3c] sm:$0xf] %vm631, %v614
        %v648 = vld [vmem:[%s316] sm:$0xf]
        %v649 = vld [vmem:[%s316 + $0x4] sm:$0xf]
        %v650 = vld [vmem:[%s316 + $0x8] sm:$0x1]
        %v651 = vld [vmem:[%s316 + $0xc] sm:$0xf]
        %v652 = vld [vmem:[%s316 + $0x10] sm:$0xf]
        %v653 = vld [vmem:[%s316 + $0x14] sm:$0x1]
        %v655 = vshrl.u32 %v648, 16
        %v657 = vrot.slane %v655, 4
        %v658 = vshll.u32 %v648, 16
        %v660 = vrot.slane %v658, 5
        %v661 = vor.u32 %v657, %v660
        %v662 = vrot.slane %v661, 4
        %v664 = vshll.u32 %v649, 16
        %v666 = vrot.slane %v664, 5
        %v667 = vsel %vm390, %v662, %v666
        %v668 = vshrl.u32 %v649, 16
        %v670 = vrot.slane %v668, 4
        %v671 = vor.u32 %v670, %v666
        %v672 = vrot.slane %v671, 4
        %v674 = vshll.u32 %v650, 16
        %v676 = vrot.slane %v674, 5
        %v677 = vsel %vm390, %v672, %v676
        %v679 = vshrl.u32 %v651, 16
        %v681 = vrot.slane %v679, 4
        %v682 = vshll.u32 %v651, 16
        %v684 = vrot.slane %v682, 5
        %v685 = vor.u32 %v681, %v684
        %v686 = vrot.slane %v685, 4
        %v688 = vshll.u32 %v652, 16
        %v690 = vrot.slane %v688, 5
        %v691 = vsel %vm390, %v686, %v690
        %v692 = vshrl.u32 %v652, 16
        %v694 = vrot.slane %v692, 4
        %v695 = vor.u32 %v694, %v690
        %v696 = vrot.slane %v695, 4
        %v698 = vshll.u32 %v653, 16
        %v700 = vrot.slane %v698, 5
        %v701 = vsel %vm390, %v696, %v700
        %702 = vrot.lane.b32.xlu0 %v667, 4
        %v703 = vpop.permute.xlu0 %702
        %704 = vrot.lane.b32.xlu0 %v677, 4
        %v705 = vpop.permute.xlu0 %704
        %706 = vrot.lane.b32.xlu0 %v691, 4
        %v707 = vpop.permute.xlu0 %706
        %708 = vrot.lane.b32.xlu0 %v701, 4
        %v709 = vpop.permute.xlu0 %708
        %714 = vst.msk [vmem:[%s359] sm:$0xf] %vm631, %v703
        %715 = vst.msk [vmem:[%s359 + $0x4] sm:$0xf] %vm631, %v705
        %716 = vst.msk [vmem:[%s359 + $0x8] sm:$0xf] %vm631, %v707
        %717 = vst.msk [vmem:[%s359 + $0xc] sm:$0xf] %vm631, %v709
        %v718 = vld [vmem:[%s298] sm:$0xe]
        %v719 = vld [vmem:[%s298 + $0x4] sm:$0xf]
        %v720 = vld [vmem:[%s298 + $0x8] sm:$0x1]
        %v721 = vld [vmem:[%s298 + $0xc] sm:$0xe]
        %v722 = vld [vmem:[%s298 + $0x10] sm:$0xf]
        %v723 = vld [vmem:[%s298 + $0x14] sm:$0x1]
        %v724 = vld [vmem:[%s298 + $0x18] sm:$0xe]
        %v725 = vld [vmem:[%s298 + $0x1c] sm:$0xf]
        %v726 = vld [vmem:[%s298 + $0x20] sm:$0x1]
        %v727 = vld [vmem:[%s298 + $0x24] sm:$0xe]
        %v728 = vld [vmem:[%s298 + $0x28] sm:$0xf]
        %v729 = vld [vmem:[%s298 + $0x2c] sm:$0x1]
        %v730 = vld [vmem:[%s298 + $0x30] sm:$0xe]
        %v731 = vld [vmem:[%s298 + $0x34] sm:$0xf]
        %v732 = vld [vmem:[%s298 + $0x38] sm:$0x1]
        %v733 = vld [vmem:[%s298 + $0x3c] sm:$0xe]
        %v734 = vld [vmem:[%s298 + $0x40] sm:$0xf]
        %v735 = vld [vmem:[%s298 + $0x44] sm:$0x1]
        %v736 = vld [vmem:[%s298 + $0x48] sm:$0xe]
        %v737 = vld [vmem:[%s298 + $0x4c] sm:$0xf]
        %v738 = vld [vmem:[%s298 + $0x50] sm:$0x1]
        %v739 = vld [vmem:[%s298 + $0x54] sm:$0xe]
        %v740 = vld [vmem:[%s298 + $0x58] sm:$0xf]
        %v741 = vld [vmem:[%s298 + $0x5c] sm:$0x1]
        %vm766 = vcmask 1042432
        %vm767 = vcmask 1046532
        %vm768 = vmor %vm766, %vm767
        %v769 = vrot.slane %v718, 5
        %v770 = vrot.slane %v769, 4
        %v771 = vrot.slane %v719, 5
        %v772 = vsel %vm768, %v770, %v771
        %v773 = vrot.slane %v771, 4
        %v774 = vrot.slane %v720, 5
        %v775 = vsel %vm768, %v773, %v774
        %v776 = vrot.slane %v721, 5
        %v777 = vrot.slane %v776, 4
        %v778 = vrot.slane %v722, 5
        %v779 = vsel %vm768, %v777, %v778
        %v780 = vrot.slane %v778, 4
        %v781 = vrot.slane %v723, 5
        %v782 = vsel %vm768, %v780, %v781
        %v783 = vrot.slane %v724, 5
        %v784 = vrot.slane %v783, 4
        %v785 = vrot.slane %v725, 5
        %v786 = vsel %vm768, %v784, %v785
        %v787 = vrot.slane %v785, 4
        %v788 = vrot.slane %v726, 5
        %v789 = vsel %vm768, %v787, %v788
        %v790 = vrot.slane %v727, 5
        %v791 = vrot.slane %v790, 4
        %v792 = vrot.slane %v728, 5
        %v793 = vsel %vm768, %v791, %v792
        %v794 = vrot.slane %v792, 4
        %v795 = vrot.slane %v729, 5
        %v796 = vsel %vm768, %v794, %v795
        %v797 = vrot.slane %v730, 5
        %v798 = vrot.slane %v797, 4
        %v799 = vrot.slane %v731, 5
        %v800 = vsel %vm768, %v798, %v799
        %v801 = vrot.slane %v799, 4
        %v802 = vrot.slane %v732, 5
        %v803 = vsel %vm768, %v801, %v802
        %v804 = vrot.slane %v733, 5
        %v805 = vrot.slane %v804, 4
        %v806 = vrot.slane %v734, 5
        %v807 = vsel %vm768, %v805, %v806
        %v808 = vrot.slane %v806, 4
        %v809 = vrot.slane %v735, 5
        %v810 = vsel %vm768, %v808, %v809
        %v811 = vrot.slane %v736, 5
        %v812 = vrot.slane %v811, 4
        %v813 = vrot.slane %v737, 5
        %v814 = vsel %vm768, %v812, %v813
        %v815 = vrot.slane %v813, 4
        %v816 = vrot.slane %v738, 5
        %v817 = vsel %vm768, %v815, %v816
        %v818 = vrot.slane %v739, 5
        %v819 = vrot.slane %v818, 4
        %v820 = vrot.slane %v740, 5
        %v821 = vsel %vm768, %v819, %v820
        %v822 = vrot.slane %v820, 4
        %v823 = vrot.slane %v741, 5
        %v824 = vsel %vm768, %v822, %v823
        %825 = vrot.lane.b32.xlu0 %v772, 8
        %v826 = vpop.permute.xlu0 %825
        %827 = vrot.lane.b32.xlu0 %v775, 8
        %v828 = vpop.permute.xlu0 %827
        %829 = vrot.lane.b32.xlu0 %v779, 8
        %v830 = vpop.permute.xlu0 %829
        %831 = vrot.lane.b32.xlu0 %v782, 8
        %v832 = vpop.permute.xlu0 %831
        %833 = vrot.lane.b32.xlu0 %v786, 8
        %v834 = vpop.permute.xlu0 %833
        %835 = vrot.lane.b32.xlu0 %v789, 8
        %v836 = vpop.permute.xlu0 %835
        %837 = vrot.lane.b32.xlu0 %v793, 8
        %v838 = vpop.permute.xlu0 %837
        %839 = vrot.lane.b32.xlu0 %v796, 8
        %v840 = vpop.permute.xlu0 %839
        %841 = vrot.lane.b32.xlu0 %v800, 8
        %v842 = vpop.permute.xlu0 %841
        %843 = vrot.lane.b32.xlu0 %v803, 8
        %v844 = vpop.permute.xlu0 %843
        %845 = vrot.lane.b32.xlu0 %v807, 8
        %v846 = vpop.permute.xlu0 %845
        %847 = vrot.lane.b32.xlu0 %v810, 8
        %v848 = vpop.permute.xlu0 %847
        %849 = vrot.lane.b32.xlu0 %v814, 8
        %v850 = vpop.permute.xlu0 %849
        %851 = vrot.lane.b32.xlu0 %v817, 8
        %v852 = vpop.permute.xlu0 %851
        %853 = vrot.lane.b32.xlu0 %v821, 8
        %v854 = vpop.permute.xlu0 %853
        %855 = vrot.lane.b32.xlu0 %v824, 8
        %v856 = vpop.permute.xlu0 %855
        %vm873 = vcmask 93248
        %874 = vst.msk [vmem:[#allocation2] sm:$0xf] %vm873, %v826
        %875 = vst.msk [vmem:[#allocation2 + $0x4] sm:$0xf] %vm873, %v828
        %876 = vst.msk [vmem:[#allocation2 + $0x8] sm:$0xf] %vm873, %v830
        %877 = vst.msk [vmem:[#allocation2 + $0xc] sm:$0xf] %vm873, %v832
        %878 = vst.msk [vmem:[#allocation2 + $0x10] sm:$0xf] %vm873, %v834
        %879 = vst.msk [vmem:[#allocation2 + $0x14] sm:$0xf] %vm873, %v836
        %880 = vst.msk [vmem:[#allocation2 + $0x18] sm:$0xf] %vm873, %v838
        %881 = vst.msk [vmem:[#allocation2 + $0x1c] sm:$0xf] %vm873, %v840
        %882 = vst.msk [vmem:[#allocation2 + $0x20] sm:$0xf] %vm873, %v842
        %883 = vst.msk [vmem:[#allocation2 + $0x24] sm:$0xf] %vm873, %v844
        %884 = vst.msk [vmem:[#allocation2 + $0x28] sm:$0xf] %vm873, %v846
        %885 = vst.msk [vmem:[#allocation2 + $0x2c] sm:$0xf] %vm873, %v848
        %886 = vst.msk [vmem:[#allocation2 + $0x30] sm:$0xf] %vm873, %v850
        %887 = vst.msk [vmem:[#allocation2 + $0x34] sm:$0xf] %vm873, %v852
        %888 = vst.msk [vmem:[#allocation2 + $0x38] sm:$0xf] %vm873, %v854
        %889 = vst.msk [vmem:[#allocation2 + $0x3c] sm:$0xf] %vm873, %v856
        %v890 = vld [vmem:[%s316] sm:$0xe]
        %v891 = vld [vmem:[%s316 + $0x4] sm:$0xf]
        %v892 = vld [vmem:[%s316 + $0x8] sm:$0x1]
        %v893 = vld [vmem:[%s316 + $0xc] sm:$0xe]
        %v894 = vld [vmem:[%s316 + $0x10] sm:$0xf]
        %v895 = vld [vmem:[%s316 + $0x14] sm:$0x1]
        %v902 = vrot.slane %v890, 5
        %v903 = vrot.slane %v902, 4
        %v904 = vrot.slane %v891, 5
        %v905 = vsel %vm768, %v903, %v904
        %v906 = vrot.slane %v904, 4
        %v907 = vrot.slane %v892, 5
        %v908 = vsel %vm768, %v906, %v907
        %v909 = vrot.slane %v893, 5
        %v910 = vrot.slane %v909, 4
        %v911 = vrot.slane %v894, 5
        %v912 = vsel %vm768, %v910, %v911
        %v913 = vrot.slane %v911, 4
        %v914 = vrot.slane %v895, 5
        %v915 = vsel %vm768, %v913, %v914
        %916 = vrot.lane.b32.xlu0 %v905, 8
        %v917 = vpop.permute.xlu0 %916
        %918 = vrot.lane.b32.xlu0 %v908, 8
        %v919 = vpop.permute.xlu0 %918
        %920 = vrot.lane.b32.xlu0 %v912, 8
        %v921 = vpop.permute.xlu0 %920
        %922 = vrot.lane.b32.xlu0 %v915, 8
        %v923 = vpop.permute.xlu0 %922
        %928 = vst.msk [vmem:[%s359] sm:$0xf] %vm873, %v917
        %929 = vst.msk [vmem:[%s359 + $0x4] sm:$0xf] %vm873, %v919
        %930 = vst.msk [vmem:[%s359 + $0x8] sm:$0xf] %vm873, %v921
        %931 = vst.msk [vmem:[%s359 + $0xc] sm:$0xf] %vm873, %v923
        %v932 = vld [vmem:[#allocation2] sm:$0xf]
        %v933 = vld [vmem:[#allocation2 + $0x4] sm:$0xf]
        %v934 = vld [vmem:[#allocation2 + $0x8] sm:$0xf]
        %v935 = vld [vmem:[#allocation2 + $0xc] sm:$0xf]
        %v936 = vld [vmem:[#allocation2 + $0x10] sm:$0xf]
        %v937 = vld [vmem:[#allocation2 + $0x14] sm:$0xf]
        %v938 = vld [vmem:[#allocation2 + $0x18] sm:$0xf]
        %v939 = vld [vmem:[#allocation2 + $0x1c] sm:$0xf]
        %v940 = vld [vmem:[#allocation2 + $0x20] sm:$0xf]
        %v941 = vld [vmem:[#allocation2 + $0x24] sm:$0xf]
        %v942 = vld [vmem:[#allocation2 + $0x28] sm:$0xf]
        %v943 = vld [vmem:[#allocation2 + $0x2c] sm:$0xf]
        %v944 = vld [vmem:[#allocation2 + $0x30] sm:$0xf]
        %v945 = vld [vmem:[#allocation2 + $0x34] sm:$0xf]
        %v946 = vld [vmem:[#allocation2 + $0x38] sm:$0xf]
        %v947 = vld [vmem:[#allocation2 + $0x3c] sm:$0xf]
        %v948 = vld [vmem:[%s2] sm:$0xf]
        %v949 = vld [vmem:[%s2 + $0x4] sm:$0x3]
        %s950 = scalar_lea.vmem [#allocation2], 8
        %v951 = vld [vmem:[%s950] sm:$0xf]
        %v952 = vld [vmem:[%s950 + $0x4] sm:$0xf]
        %v953 = vld [vmem:[%s950 + $0x8] sm:$0xf]
        %v954 = vld [vmem:[%s950 + $0xc] sm:$0xf]
        %v955 = vld [vmem:[%s950 + $0x10] sm:$0xf]
        %v956 = vld [vmem:[%s950 + $0x14] sm:$0xf]
        %v957 = vld [vmem:[%s950 + $0x18] sm:$0xf]
        %v958 = vld [vmem:[%s950 + $0x1c] sm:$0xf]
        %v959 = vld [vmem:[%s950 + $0x20] sm:$0xf]
        %v960 = vld [vmem:[%s950 + $0x24] sm:$0xf]
        %v961 = vld [vmem:[%s950 + $0x28] sm:$0xf]
        %v962 = vld [vmem:[%s950 + $0x2c] sm:$0xf]
        %v963 = vld [vmem:[%s950 + $0x30] sm:$0xf]
        %v964 = vld [vmem:[%s950 + $0x34] sm:$0xf]
        %v965 = vld [vmem:[%s950 + $0x38] sm:$0xf]
        %v966 = vld [vmem:[%s950 + $0x3c] sm:$0xf]
        %s967 = scalar_lea.vmem %s2, 8
        %v968 = vld [vmem:[%s967] sm:$0xf]
        %v969 = vld [vmem:[%s967 + $0x4] sm:$0x3]
        %v986 = vunpack.c.l.b16 %v951
        %v987 = vunpack.c.l.b16 %v952
        %v988 = vunpack.c.l.b16 %v953
        %v989 = vunpack.c.l.b16 %v954
        %v990 = vunpack.c.l.b16 %v955
        %v991 = vunpack.c.l.b16 %v956
        %v992 = vunpack.c.l.b16 %v957
        %v993 = vunpack.c.l.b16 %v958
        %v994 = vunpack.c.l.b16 %v959
        %v995 = vunpack.c.l.b16 %v960
        %v996 = vunpack.c.l.b16 %v961
        %v997 = vunpack.c.l.b16 %v962
        %v998 = vunpack.c.l.b16 %v963
        %v999 = vunpack.c.l.b16 %v964
        %v1000 = vunpack.c.l.b16 %v965
        %v1001 = vunpack.c.l.b16 %v966
        %v1002 = vpack.c.b16 %v987, %v986
        %v1003 = vpack.c.b16 %v989, %v988
        %v1004 = vpack.c.b16 %v991, %v990
        %v1005 = vpack.c.b16 %v993, %v992
        %v1006 = vpack.c.b16 %v995, %v994
        %v1007 = vpack.c.b16 %v997, %v996
        %v1008 = vpack.c.b16 %v999, %v998
        %v1009 = vpack.c.b16 %v1001, %v1000
        %v1012 = vunpack.c.l.b16 %v968
        %v1013 = vunpack.c.l.b16 %v969
        %v1014 = vpack.c.b16 %v1013, %v1012
        %vm1015 = vcmask 97280
        %v1017 = vsel %vm1015, %v1002, 0
        %v1020 = vsel %vm1015, %v1003, 0
        %v1023 = vsel %vm1015, %v1004, 0
        %v1026 = vsel %vm1015, %v1005, 0
        %v1029 = vsel %vm1015, %v1006, 0
        %v1032 = vsel %vm1015, %v1007, 0
        %v1035 = vsel %vm1015, %v1008, 0
        %v1038 = vsel %vm1015, %v1009, 0
        %vm1040 = vcmask 1045504
        %v1042 = vsel %vm1040, %v1014, 0
        %1044 = vmatpush.bf16.msra.mxu0 0
        %1045 = vmatpush.bf16.msra.mxu0 0
        %1046 = vmatpush.bf16.msra.mxu0 0
        %1047 = vmatpush.bf16.msra.mxu0 0
        %1048 = vmatpush.bf16.msra.mxu0 0
        %1049 = vmatpush.bf16.msra.mxu0 0
        %1050 = vmatpush.bf16.msra.mxu0 0
        %1051 = vmatpush.bf16.msra.mxu0 %v1042
        %1052 = vmatmul.bf16.gmra.mxu0 %v1017
        %v1053 = vpop.f32.mrf.mxu0
        %v1054 = vadd.f32 0.0, %v1053
        %v1055 = vpop.f32.mrf.mxu0
        %v1056 = vadd.f32 0.0, %v1055
        %1057 = vmatmul.bf16.gmra.mxu0 %v1020
        %v1058 = vpop.f32.mrf.mxu0
        %v1059 = vadd.f32 0.0, %v1058
        %v1060 = vpop.f32.mrf.mxu0
        %v1061 = vadd.f32 0.0, %v1060
        %1062 = vmatmul.bf16.gmra.mxu0 %v1023
        %v1063 = vpop.f32.mrf.mxu0
        %v1064 = vadd.f32 0.0, %v1063
        %v1065 = vpop.f32.mrf.mxu0
        %v1066 = vadd.f32 0.0, %v1065
        %1067 = vmatmul.bf16.gmra.mxu0 %v1026
        %v1068 = vpop.f32.mrf.mxu0
        %v1069 = vadd.f32 0.0, %v1068
        %v1070 = vpop.f32.mrf.mxu0
        %v1071 = vadd.f32 0.0, %v1070
        %1072 = vmatmul.bf16.gmra.mxu0 %v1029
        %v1073 = vpop.f32.mrf.mxu0
        %v1074 = vadd.f32 0.0, %v1073
        %v1075 = vpop.f32.mrf.mxu0
        %v1076 = vadd.f32 0.0, %v1075
        %1077 = vmatmul.bf16.gmra.mxu0 %v1032
        %v1078 = vpop.f32.mrf.mxu0
        %v1079 = vadd.f32 0.0, %v1078
        %v1080 = vpop.f32.mrf.mxu0
        %v1081 = vadd.f32 0.0, %v1080
        %1082 = vmatmul.bf16.gmra.mxu0 %v1035
        %v1083 = vpop.f32.mrf.mxu0
        %v1084 = vadd.f32 0.0, %v1083
        %v1085 = vpop.f32.mrf.mxu0
        %v1086 = vadd.f32 0.0, %v1085
        %1087 = vmatmul.bf16.gmra.mxu0 %v1038
        %v1088 = vpop.f32.mrf.mxu0
        %v1089 = vadd.f32 0.0, %v1088
        %v1090 = vpop.f32.mrf.mxu0
        %v1091 = vadd.f32 0.0, %v1090
        %1092 = vdwg.mxu0
        %v1109 = vunpack.c.l.b16 %v932
        %v1110 = vunpack.c.l.b16 %v933
        %v1111 = vunpack.c.l.b16 %v934
        %v1112 = vunpack.c.l.b16 %v935
        %v1113 = vunpack.c.l.b16 %v936
        %v1114 = vunpack.c.l.b16 %v937
        %v1115 = vunpack.c.l.b16 %v938
        %v1116 = vunpack.c.l.b16 %v939
        %v1117 = vunpack.c.l.b16 %v940
        %v1118 = vunpack.c.l.b16 %v941
        %v1119 = vunpack.c.l.b16 %v942
        %v1120 = vunpack.c.l.b16 %v943
        %v1121 = vunpack.c.l.b16 %v944
        %v1122 = vunpack.c.l.b16 %v945
        %v1123 = vunpack.c.l.b16 %v946
        %v1124 = vunpack.c.l.b16 %v947
        %v1125 = vpack.c.b16 %v1110, %v1109
        %v1126 = vpack.c.b16 %v1112, %v1111
        %v1127 = vpack.c.b16 %v1114, %v1113
        %v1128 = vpack.c.b16 %v1116, %v1115
        %v1129 = vpack.c.b16 %v1118, %v1117
        %v1130 = vpack.c.b16 %v1120, %v1119
        %v1131 = vpack.c.b16 %v1122, %v1121
        %v1132 = vpack.c.b16 %v1124, %v1123
        %v1135 = vunpack.c.l.b16 %v948
        %v1136 = vunpack.c.l.b16 %v949
        %v1137 = vpack.c.b16 %v1136, %v1135
        %v1139 = vsel %vm1015, %v1125, 0
        %v1142 = vsel %vm1015, %v1126, 0
        %v1145 = vsel %vm1015, %v1127, 0
        %v1148 = vsel %vm1015, %v1128, 0
        %v1151 = vsel %vm1015, %v1129, 0
        %v1154 = vsel %vm1015, %v1130, 0
        %v1157 = vsel %vm1015, %v1131, 0
        %v1160 = vsel %vm1015, %v1132, 0
        %v1163 = vsel %vm1040, %v1137, 0
        %1165 = vmatpush.bf16.msra.mxu0 0
        %1166 = vmatpush.bf16.msra.mxu0 0
        %1167 = vmatpush.bf16.msra.mxu0 0
        %1168 = vmatpush.bf16.msra.mxu0 0
        %1169 = vmatpush.bf16.msra.mxu0 0
        %1170 = vmatpush.bf16.msra.mxu0 0
        %1171 = vmatpush.bf16.msra.mxu0 0
        %1172 = vmatpush.bf16.msra.mxu0 %v1163
        %1173 = vmatmul.bf16.gmra.mxu0 %v1139
        %v1174 = vpop.f32.mrf.mxu0
        %v1175 = vadd.f32 %v1054, %v1174
        %v1176 = vpop.f32.mrf.mxu0
        %v1177 = vadd.f32 %v1056, %v1176
        %1178 = vmatmul.bf16.gmra.mxu0 %v1142
        %v1179 = vpop.f32.mrf.mxu0
        %v1180 = vadd.f32 %v1059, %v1179
        %v1181 = vpop.f32.mrf.mxu0
        %v1182 = vadd.f32 %v1061, %v1181
        %1183 = vmatmul.bf16.gmra.mxu0 %v1145
        %v1184 = vpop.f32.mrf.mxu0
        %v1185 = vadd.f32 %v1064, %v1184
        %v1186 = vpop.f32.mrf.mxu0
        %v1187 = vadd.f32 %v1066, %v1186
        %1188 = vmatmul.bf16.gmra.mxu0 %v1148
        %v1189 = vpop.f32.mrf.mxu0
        %v1190 = vadd.f32 %v1069, %v1189
        %v1191 = vpop.f32.mrf.mxu0
        %v1192 = vadd.f32 %v1071, %v1191
        %1193 = vmatmul.bf16.gmra.mxu0 %v1151
        %v1194 = vpop.f32.mrf.mxu0
        %v1195 = vadd.f32 %v1074, %v1194
        %v1196 = vpop.f32.mrf.mxu0
        %v1197 = vadd.f32 %v1076, %v1196
        %1198 = vmatmul.bf16.gmra.mxu0 %v1154
        %v1199 = vpop.f32.mrf.mxu0
        %v1200 = vadd.f32 %v1079, %v1199
        %v1201 = vpop.f32.mrf.mxu0
        %v1202 = vadd.f32 %v1081, %v1201
        %1203 = vmatmul.bf16.gmra.mxu0 %v1157
        %v1204 = vpop.f32.mrf.mxu0
        %v1205 = vadd.f32 %v1084, %v1204
        %v1206 = vpop.f32.mrf.mxu0
        %v1207 = vadd.f32 %v1086, %v1206
        %1208 = vmatmul.bf16.gmra.mxu0 %v1160
        %v1209 = vpop.f32.mrf.mxu0
        %v1210 = vadd.f32 %v1089, %v1209
        %v1211 = vpop.f32.mrf.mxu0
        %v1212 = vadd.f32 %v1091, %v1211
        %1213 = vdwg.mxu0
        %s1214 = scalar_lea.vmem [#allocation2], 16
        %v1215 = vld [vmem:[%s1214] sm:$0xf]
        %v1216 = vld [vmem:[%s1214 + $0x4] sm:$0xf]
        %v1217 = vld [vmem:[%s1214 + $0x8] sm:$0xf]
        %v1218 = vld [vmem:[%s1214 + $0xc] sm:$0xf]
        %v1219 = vld [vmem:[%s1214 + $0x10] sm:$0xf]
        %v1220 = vld [vmem:[%s1214 + $0x14] sm:$0xf]
        %v1221 = vld [vmem:[%s1214 + $0x18] sm:$0xf]
        %v1222 = vld [vmem:[%s1214 + $0x1c] sm:$0xf]
        %v1223 = vld [vmem:[%s1214 + $0x20] sm:$0xf]
        %v1224 = vld [vmem:[%s1214 + $0x24] sm:$0xf]
        %v1225 = vld [vmem:[%s1214 + $0x28] sm:$0xf]
        %v1226 = vld [vmem:[%s1214 + $0x2c] sm:$0xf]
        %v1227 = vld [vmem:[%s1214 + $0x30] sm:$0xf]
        %v1228 = vld [vmem:[%s1214 + $0x34] sm:$0xf]
        %v1229 = vld [vmem:[%s1214 + $0x38] sm:$0xf]
        %v1230 = vld [vmem:[%s1214 + $0x3c] sm:$0xf]
        %s1231 = scalar_lea.vmem %s2, 16
        %v1232 = vld [vmem:[%s1231] sm:$0xf]
        %v1233 = vld [vmem:[%s1231 + $0x4] sm:$0x3]
        %v1250 = vunpack.c.l.b16 %v1215
        %v1251 = vunpack.c.l.b16 %v1216
        %v1252 = vunpack.c.l.b16 %v1217
        %v1253 = vunpack.c.l.b16 %v1218
        %v1254 = vunpack.c.l.b16 %v1219
        %v1255 = vunpack.c.l.b16 %v1220
        %v1256 = vunpack.c.l.b16 %v1221
        %v1257 = vunpack.c.l.b16 %v1222
        %v1258 = vunpack.c.l.b16 %v1223
        %v1259 = vunpack.c.l.b16 %v1224
        %v1260 = vunpack.c.l.b16 %v1225
        %v1261 = vunpack.c.l.b16 %v1226
        %v1262 = vunpack.c.l.b16 %v1227
        %v1263 = vunpack.c.l.b16 %v1228
        %v1264 = vunpack.c.l.b16 %v1229
        %v1265 = vunpack.c.l.b16 %v1230
        %v1266 = vpack.c.b16 %v1251, %v1250
        %v1267 = vpack.c.b16 %v1253, %v1252
        %v1268 = vpack.c.b16 %v1255, %v1254
        %v1269 = vpack.c.b16 %v1257, %v1256
        %v1270 = vpack.c.b16 %v1259, %v1258
        %v1271 = vpack.c.b16 %v1261, %v1260
        %v1272 = vpack.c.b16 %v1263, %v1262
        %v1273 = vpack.c.b16 %v1265, %v1264
        %v1276 = vunpack.c.l.b16 %v1232
        %v1277 = vunpack.c.l.b16 %v1233
        %v1278 = vpack.c.b16 %v1277, %v1276
        %v1280 = vsel %vm1015, %v1266, 0
        %v1283 = vsel %vm1015, %v1267, 0
        %v1286 = vsel %vm1015, %v1268, 0
        %v1289 = vsel %vm1015, %v1269, 0
        %v1292 = vsel %vm1015, %v1270, 0
        %v1295 = vsel %vm1015, %v1271, 0
        %v1298 = vsel %vm1015, %v1272, 0
        %v1301 = vsel %vm1015, %v1273, 0
        %v1304 = vsel %vm1040, %v1278, 0
        %1306 = vmatpush.bf16.msra.mxu0 0
        %1307 = vmatpush.bf16.msra.mxu0 0
        %1308 = vmatpush.bf16.msra.mxu0 0
        %1309 = vmatpush.bf16.msra.mxu0 0
        %1310 = vmatpush.bf16.msra.mxu0 0
        %1311 = vmatpush.bf16.msra.mxu0 0
        %1312 = vmatpush.bf16.msra.mxu0 0
        %1313 = vmatpush.bf16.msra.mxu0 %v1304
        %1314 = vmatmul.bf16.gmra.mxu0 %v1280
        %v1315 = vpop.f32.mrf.mxu0
        %v1316 = vadd.f32 0.0, %v1315
        %v1317 = vpop.f32.mrf.mxu0
        %v1318 = vadd.f32 0.0, %v1317
        %1319 = vmatmul.bf16.gmra.mxu0 %v1283
        %v1320 = vpop.f32.mrf.mxu0
        %v1321 = vadd.f32 0.0, %v1320
        %v1322 = vpop.f32.mrf.mxu0
        %v1323 = vadd.f32 0.0, %v1322
        %1324 = vmatmul.bf16.gmra.mxu0 %v1286
        %v1325 = vpop.f32.mrf.mxu0
        %v1326 = vadd.f32 0.0, %v1325
        %v1327 = vpop.f32.mrf.mxu0
        %v1328 = vadd.f32 0.0, %v1327
        %1329 = vmatmul.bf16.gmra.mxu0 %v1289
        %v1330 = vpop.f32.mrf.mxu0
        %v1331 = vadd.f32 0.0, %v1330
        %v1332 = vpop.f32.mrf.mxu0
        %v1333 = vadd.f32 0.0, %v1332
        %1334 = vmatmul.bf16.gmra.mxu0 %v1292
        %v1335 = vpop.f32.mrf.mxu0
        %v1336 = vadd.f32 0.0, %v1335
        %v1337 = vpop.f32.mrf.mxu0
        %v1338 = vadd.f32 0.0, %v1337
        %1339 = vmatmul.bf16.gmra.mxu0 %v1295
        %v1340 = vpop.f32.mrf.mxu0
        %v1341 = vadd.f32 0.0, %v1340
        %v1342 = vpop.f32.mrf.mxu0
        %v1343 = vadd.f32 0.0, %v1342
        %1344 = vmatmul.bf16.gmra.mxu0 %v1298
        %v1345 = vpop.f32.mrf.mxu0
        %v1346 = vadd.f32 0.0, %v1345
        %v1347 = vpop.f32.mrf.mxu0
        %v1348 = vadd.f32 0.0, %v1347
        %1349 = vmatmul.bf16.gmra.mxu0 %v1301
        %v1350 = vpop.f32.mrf.mxu0
        %v1351 = vadd.f32 0.0, %v1350
        %v1352 = vpop.f32.mrf.mxu0
        %v1353 = vadd.f32 0.0, %v1352
        %1354 = vdwg.mxu0
        %v1355 = vadd.f32 %v1175, %v1316
        %v1356 = vadd.f32 %v1177, %v1318
        %v1357 = vadd.f32 %v1180, %v1321
        %v1358 = vadd.f32 %v1182, %v1323
        %v1359 = vadd.f32 %v1185, %v1326
        %v1360 = vadd.f32 %v1187, %v1328
        %v1361 = vadd.f32 %v1190, %v1331
        %v1362 = vadd.f32 %v1192, %v1333
        %v1363 = vadd.f32 %v1195, %v1336
        %v1364 = vadd.f32 %v1197, %v1338
        %v1365 = vadd.f32 %v1200, %v1341
        %v1366 = vadd.f32 %v1202, %v1343
        %v1367 = vadd.f32 %v1205, %v1346
        %v1368 = vadd.f32 %v1207, %v1348
        %v1369 = vadd.f32 %v1210, %v1351
        %v1370 = vadd.f32 %v1212, %v1353
        %v1371 = vpack.c.bf16 %v1355, %v1355
        %v1372 = vpack.c.bf16 %v1356, %v1356
        %v1373 = vpack.c.bf16 %v1357, %v1357
        %v1374 = vpack.c.bf16 %v1358, %v1358
        %v1375 = vpack.c.bf16 %v1359, %v1359
        %v1376 = vpack.c.bf16 %v1360, %v1360
        %v1377 = vpack.c.bf16 %v1361, %v1361
        %v1378 = vpack.c.bf16 %v1362, %v1362
        %v1379 = vpack.c.bf16 %v1363, %v1363
        %v1380 = vpack.c.bf16 %v1364, %v1364
        %v1381 = vpack.c.bf16 %v1365, %v1365
        %v1382 = vpack.c.bf16 %v1366, %v1366
        %v1383 = vpack.c.bf16 %v1367, %v1367
        %v1384 = vpack.c.bf16 %v1368, %v1368
        %v1385 = vpack.c.bf16 %v1369, %v1369
        %v1386 = vpack.c.bf16 %v1370, %v1370
        %1387 = vst [vmem:[%s276] sm:$0xf] %v1371
        %1388 = vst [vmem:[%s276 + $0x4] sm:$0xf] %v1372
        %1389 = vst [vmem:[%s276 + $0x8] sm:$0xf] %v1373
        %1390 = vst [vmem:[%s276 + $0xc] sm:$0xf] %v1374
        %1391 = vst [vmem:[%s276 + $0x10] sm:$0xf] %v1375
        %1392 = vst [vmem:[%s276 + $0x14] sm:$0xf] %v1376
        %1393 = vst [vmem:[%s276 + $0x18] sm:$0xf] %v1377
        %1394 = vst [vmem:[%s276 + $0x1c] sm:$0xf] %v1378
        %1395 = vst [vmem:[%s276 + $0x20] sm:$0xf] %v1379
        %1396 = vst [vmem:[%s276 + $0x24] sm:$0xf] %v1380
        %1397 = vst [vmem:[%s276 + $0x28] sm:$0xf] %v1381
        %1398 = vst [vmem:[%s276 + $0x2c] sm:$0xf] %v1382
        %1399 = vst [vmem:[%s276 + $0x30] sm:$0xf] %v1383
        %1400 = vst [vmem:[%s276 + $0x34] sm:$0xf] %v1384
        %1401 = vst [vmem:[%s276 + $0x38] sm:$0xf] %v1385
        %1402 = vst [vmem:[%s276 + $0x3c] sm:$0xf] %v1386
        %v1403 = vadd.f32 %v1355, %v1356
        %v1404 = vadd.f32 %v1403, %v1357
        %v1405 = vadd.f32 %v1404, %v1358
        %v1406 = vadd.f32 %v1405, %v1359
        %v1407 = vadd.f32 %v1406, %v1360
        %v1408 = vadd.f32 %v1407, %v1361
        %v1409 = vadd.f32 %v1408, %v1362
        %v1410 = vadd.f32 %v1409, %v1363
        %v1411 = vadd.f32 %v1410, %v1364
        %v1412 = vadd.f32 %v1411, %v1365
        %v1413 = vadd.f32 %v1412, %v1366
        %v1414 = vadd.f32 %v1413, %v1367
        %v1415 = vadd.f32 %v1414, %v1368
        %v1416 = vadd.f32 %v1415, %v1369
        %v1417 = vadd.f32 %v1416, %v1370
        %v1418 = vrot.slane %v1417, 4
        %v1419 = vadd.f32 %v1417, %v1418
        %v1420 = vrot.slane %v1419, 2
        %v1421 = vadd.f32 %v1419, %v1420
        %v1422 = vrot.slane %v1421, 1
        %v1423 = vadd.f32 %v1421, %v1422
        %1424 = vst [vmem:[%s283] sm:$0x1] %v1423
        %v1425 = vmul.f32 %v1355, %v1355
        %v1426 = vmul.f32 %v1356, %v1356
        %v1427 = vmul.f32 %v1357, %v1357
        %v1428 = vmul.f32 %v1358, %v1358
        %v1429 = vmul.f32 %v1359, %v1359
        %v1430 = vmul.f32 %v1360, %v1360
        %v1431 = vmul.f32 %v1361, %v1361
        %v1432 = vmul.f32 %v1362, %v1362
        %v1433 = vmul.f32 %v1363, %v1363
        %v1434 = vmul.f32 %v1364, %v1364
        %v1435 = vmul.f32 %v1365, %v1365
        %v1436 = vmul.f32 %v1366, %v1366
        %v1437 = vmul.f32 %v1367, %v1367
        %v1438 = vmul.f32 %v1368, %v1368
        %v1439 = vmul.f32 %v1369, %v1369
        %v1440 = vmul.f32 %v1370, %v1370
        %v1441 = vadd.f32 %v1425, %v1426
        %v1442 = vadd.f32 %v1441, %v1427
        %v1443 = vadd.f32 %v1442, %v1428
        %v1444 = vadd.f32 %v1443, %v1429
        %v1445 = vadd.f32 %v1444, %v1430
        %v1446 = vadd.f32 %v1445, %v1431
        %v1447 = vadd.f32 %v1446, %v1432
        %v1448 = vadd.f32 %v1447, %v1433
        %v1449 = vadd.f32 %v1448, %v1434
        %v1450 = vadd.f32 %v1449, %v1435
        %v1451 = vadd.f32 %v1450, %v1436
        %v1452 = vadd.f32 %v1451, %v1437
        %v1453 = vadd.f32 %v1452, %v1438
        %v1454 = vadd.f32 %v1453, %v1439
        %v1455 = vadd.f32 %v1454, %v1440
        %v1456 = vrot.slane %v1455, 4
        %v1457 = vadd.f32 %v1455, %v1456
        %v1458 = vrot.slane %v1457, 2
        %v1459 = vadd.f32 %v1457, %v1458
        %v1460 = vrot.slane %v1459, 1
        %v1461 = vadd.f32 %v1459, %v1460
        %1462 = vst [vmem:[%s283 + $0x1] sm:$0x1] %v1461
        %s1463 = sand.u32 %s125, 1
        %s1464 = scalar_lea.sflag [#allocation4], %s1463
        %s1465 = sand.u32 %s125, 1
        %s1466 = smul.addr %s1465, 64
        %s1467 = scalar_lea.vmem [#allocation3], %s1466
        %s1468 = sand.u32 %s153, 1
        %s1469 = scalar_lea.sflag [#allocation6], %s1468
        %s1470 = sand.u32 %s153, 1
        %s1471 = smul.addr %s1470, 2
        %s1472 = scalar_lea.vmem [#allocation5], %s1471
        // Predicated region
        $region33: #{tpu_custom_call.1} parent=31 // pred_check
          %p1473 = pneg %p135
        $region34: #{tpu_custom_call.1} parent=31 // pred_check_branch
          %1475 = sbr.rel (%p1473) target = $region36
        $region35: #{tpu_custom_call.1} parent=31 // pred_region
          %s1476 = smul.u32 16, %s27
          %1478 = vsyncadd %s1464, 0
          %s1479 = smul.addr %s26, 32
          %s1480 = sadd.s32 %s1476, %s1479
          %s1481 = smul.addr %s1480, 4
          %s1482 = scalar_lea.hbm %s3, %s1481
          %s1483 = sshll.u32 %s1467, 4
          %s1484 = int_to_ptr.vmem [resolvable:$true] %s1483
          %s1485 = sshll.u32 %s1482, 4
          %s1486 = int_to_ptr.hbm [resolvable:$true] %s1485
          %1491 = dma.vmem_to_hbm [thread:$0]  %s1484, 1024, %s1486, %s1464, 64, 64, 4
        $region36: #{tpu_custom_call.1} parent=31 // pred_fallthru
          _
        // Predicated region
        $region37: #{tpu_custom_call.1} parent=31 // pred_check
          %p1492 = pneg %p163
        $region38: #{tpu_custom_call.1} parent=31 // pred_check_branch
          %1494 = sbr.rel (%p1492) target = $region40
        $region39: #{tpu_custom_call.1} parent=31 // pred_region
          %1496 = vsyncadd %s1469, 0
          %s1497 = smul.addr %s26, 2
          %s1498 = sadd.s32 %s27, %s1497
          %s1499 = smul.addr %s1498, 2
          %s1500 = scalar_lea.hbm %s4, %s1499
          %s1502 = sshll.u32 %s1472, 4
          %s1503 = int_to_ptr.vmem [resolvable:$true] %s1502
          %s1504 = sshll.u32 %s1500, 4
          %s1505 = int_to_ptr.hbm [resolvable:$true] %s1504
          %1507 = dma.vmem_to_hbm [thread:$0]  %s1503, 32, %s1505, %s1469
        $region40: #{tpu_custom_call.1} parent=31 // pred_fallthru
          _
      $region32: #{tpu_custom_call.1} parent=5 // pred_fallthru
        _
      %p1508 = scmp.le.s32.totalorder 2, %s17
      // Predicated region
      $region41: #{tpu_custom_call.1} parent=5 // pred_check
        %p1509 = pneg %p1508
      $region42: #{tpu_custom_call.1} parent=5 // pred_check_branch
        %1511 = sbr.rel (%p1509) target = $region44
      $region43: #{tpu_custom_call.1} parent=5 // pred_region
        %s1512 = ssub.s32 %s17, 2
        // Predicated region
        $region45: #{tpu_custom_call.1} parent=43 // pred_check
          %p1513 = pneg %p141
        $region46: #{tpu_custom_call.1} parent=43 // pred_check_branch
          %1515 = sbr.rel (%p1513) target = $region48
        $region47: #{tpu_custom_call.1} parent=43 // pred_region
          %s1516 = sand.u32 %s126, 1
          %s1517 = scalar_lea.sflag [#allocation4], %s1516
          %s1518 = sand.u32 %s126, 1
          %s1519 = smul.addr %s1518, 64
          %s1520 = scalar_lea.vmem [#allocation3], %s1519
          %1522 = dma.done %s1517, 1024
        $region48: #{tpu_custom_call.1} parent=43 // pred_fallthru
          _
        // Predicated region
        $region49: #{tpu_custom_call.1} parent=43 // pred_check
          %p1523 = pneg %p169
        $region50: #{tpu_custom_call.1} parent=43 // pred_check_branch
          %1525 = sbr.rel (%p1523) target = $region52
        $region51: #{tpu_custom_call.1} parent=43 // pred_region
          %s1526 = sand.u32 %s154, 1
          %s1527 = scalar_lea.sflag [#allocation6], %s1526
          %s1528 = sand.u32 %s154, 1
          %s1529 = smul.addr %s1528, 2
          %s1530 = scalar_lea.vmem [#allocation5], %s1529
          %1532 = dma.done %s1527, 32
        $region52: #{tpu_custom_call.1} parent=43 // pred_fallthru
          _
      $region44: #{tpu_custom_call.1} parent=5 // pred_fallthru
        _
    $region6: #{tpu_custom_call.1} parent=1 // loop_footer
      %s21 = sadd.s32 1, %s17
    $region7: #{tpu_custom_call.1} parent=1 // loop_footer_branch
      %16 = sbr.rel target = $region3
    $region8: #{tpu_custom_call.1} parent=1 // loop_exit
      _
    %1533 = vsyncpa [#allocation4], 1
    %s1534 = scalar_lea.sflag [#allocation4], 1
    %1535 = vsyncpa %s1534, 1
    %1536 = vsyncpa [#allocation6], 1
    %s1537 = scalar_lea.sflag [#allocation6], 1
    %1538 = vsyncpa %s1537, 1

</llo_original>
